<compile_context>
chip_gen: v6e
topology: v6e:2x2x1
jax: 0.10.0
libtpu: 0.0.40
codegen_flags: <defaults>
</compile_context>

<pallas_src>
import jax
import jax.numpy as jnp
from jax.experimental import pallas as pl
from jax.experimental.pallas import tpu as pltpu


# ----------------------------- Pallas kernel -------------------------------- #

def make_fused_kernel(num_layers, seq_len, batch, hidden):
    """Build the fused ConvLSTM-stack + head kernel for static (L, S, B, H)."""
    S, B, H = seq_len, batch, hidden

    def kernel(x_ref, w_ref, b_ref, hw_ref, hb_ref, out_ref):
        # x_ref  : (S*B, H)     time-major flat input, channels zero-padded to H
        # w_ref  : (L, 2H, 4H)  per-layer packed [Wx ; Wh] (BN folded into Wx)
        # b_ref  : (L, 1, 4H)   per-layer bias (BN folded)
        # hw_ref : (1, H)       Linear head weight row (BN folded)
        # hb_ref : (1, 1)       Linear head bias (BN folded)
        # out_ref: (B, 1)
        cur = x_ref[...]                                    # (S*B, H) value
        last_h = None
        for l in range(num_layers):                         # L is static
            wxt = w_ref[l, :H, :]                           # (H, 4H) static slice
            wht = w_ref[l, H:, :]                           # (H, 4H)
            bias = b_ref[l]                                 # (1, 4H), hoisted bcast

            # Hoisted input projection for all S steps: one MXU matmul / layer.
            xp = jnp.dot(cur, wxt, preferred_element_type=jnp.float32) + bias

            # Recurrent state stays in values (vregs) for the unrolled loop.
            h = jnp.zeros((B, H), jnp.float32)
            c = jnp.zeros((B, H), jnp.float32)
            hs = []
            last_layer = (l == num_layers - 1)
            for t in range(S):                              # S is static (small)
                # TODO(synk): pin wht in MXU weight regs (matmul_push_rhs) to
                # avoid re-loading the RHS on every step of the serial chain.
                z = xp[t * B:(t + 1) * B, :] + jnp.dot(
                    h, wht, preferred_element_type=jnp.float32)        # (B, 4H)
                ifo = jax.nn.sigmoid(z[:, :3 * H])          # one EUP push (i,f,o)
                g = jnp.tanh(z[:, 3 * H:])                  # one EUP push
                i = ifo[:, 0 * H:1 * H]
                f = ifo[:, 1 * H:2 * H]
                o = ifo[:, 2 * H:3 * H]
                c = f * c + i * g
                h = o * jnp.tanh(c)                         # one EUP push
                if not last_layer:
                    hs.append(h)
            if last_layer:
                last_h = h                                  # only t=S-1 feeds head
            else:
                cur = jnp.concatenate(hs, axis=0)           # (S*B, H), stays in vregs

        # Head: VPU multiply + lane reduction (no 1-column MXU matmul at the tail).
        logits = jnp.sum(last_h * hw_ref[...], axis=-1, keepdims=True) + hb_ref[...]
        out_ref[...] = jax.nn.sigmoid(logits)

    return kernel


# ----------------------------- pallas_call glue ----------------------------- #

def _full_spec(shape):
    zeros = (0,) * len(shape)
    return pl.BlockSpec(shape, lambda i: zeros)


def conv_lstm_travel_time(x_bcs, params, padding, eps=1e-5):
    """x_bcs: (B, num_channels, seq_len), matching the PyTorch NCW input."""
    B, C, S = x_bcs.shape
    layers = params["layers"]
    L = len(layers)
    H = layers[0]["conv_w"].shape[0] // 4
    K = layers[0]["conv_w"].shape[2]
    # Center-tap reduction of the Conv1d on a length-1 signal only holds here.
    assert K == 2 * padding + 1, "requires kernel_size == 2*padding + 1"
    assert C <= H, "input channels are zero-padded up to H for uniform packing"

    # time-major, flattened: (S, B, C) -> (S*B, C), zero-padded to H channels so
    # every layer's packed weight slab has the same (2H, 4H) shape.
    x2d = jnp.transpose(x_bcs, (2, 0, 1)).reshape(S * B, C).astype(jnp.float32)
    x2d = jnp.pad(x2d, ((0, 0), (0, H - C)))

    w_all, b_all = [], []
    prev_scale = None
    prev_shift = None
    cin = C
    for layer in layers:
        W = layer["conv_w"][:, :, padding]                 # (4H, cin + H) center tap
        wxt = jnp.transpose(W[:, :cin])                    # (cin, 4H)
        wht = jnp.transpose(W[:, cin:])                    # (H, 4H)
        b = layer["conv_b"]                                # (4H,)
        if prev_scale is not None:
            # Fold previous layer's eval-mode BatchNorm affine into this projection:
            #   (h*scale + shift) @ wxt + b == h @ (scale[:,None]*wxt) + (shift@wxt + b)
            b = b + prev_shift @ wxt
            wxt = prev_scale[:, None] * wxt
        if cin < H:
            wxt = jnp.pad(wxt, ((0, H - cin), (0, 0)))     # zero rows match padded x
        scale = layer["gamma"] / jnp.sqrt(layer["rvar"] + eps)
        shift = layer["beta"] - layer["rmean"] * scale
        w_all.append(jnp.concatenate([wxt, wht], axis=0))  # (2H, 4H)
        b_all.append(b.reshape(1, -1))                     # (1, 4H)
        prev_scale, prev_shift = scale, shift
        cin = H
    w_all = jnp.stack(w_all, axis=0).astype(jnp.float32)   # (L, 2H, 4H)
    b_all = jnp.stack(b_all, axis=0).astype(jnp.float32)   # (L, 1, 4H)

    # Fold last layer's BatchNorm into the Linear head; pass as a lane-dense row.
    head_wt = jnp.transpose(params["lin_w"])               # (H, 1)
    head_b = (params["lin_b"] + prev_shift @ head_wt).reshape(1, 1)
    head_w = (prev_scale[:, None] * head_wt).reshape(1, H)

    flat_args = [x2d, w_all, b_all, head_w, head_b]        # 5 inputs total
    kernel = make_fused_kernel(L, S, B, H)
    return pl.pallas_call(
        kernel,
        out_shape=jax.ShapeDtypeStruct((B, 1), jnp.float32),
        grid=(1,),
        in_specs=[_full_spec(a.shape) for a in flat_args],
        out_specs=_full_spec((B, 1)),
        compiler_params=pltpu.CompilerParams(dimension_semantics=("arbitrary",)),
    )(*flat_args)


# --------------------------- parameters & reference -------------------------- #

def init_params(key, num_channels, num_kernels, kernel_size, num_layers):
    layers = []
    cin = num_channels
    H = num_kernels
    for _ in range(num_layers):
        key, k1, k2, k3, k4, k5, k6 = jax.random.split(key, 7)
        layers.append(dict(
            conv_w=0.1 * jax.random.normal(k1, (4 * H, cin + H, kernel_size), jnp.float32),
            conv_b=0.1 * jax.random.normal(k2, (4 * H,), jnp.float32),
            gamma=1.0 + 0.1 * jax.random.normal(k3, (H,), jnp.float32),
            beta=0.1 * jax.random.normal(k4, (H,), jnp.float32),
            rmean=0.1 * jax.random.normal(k5, (H,), jnp.float32),
            rvar=0.5 + jax.random.uniform(k6, (H,), jnp.float32),
        ))
        cin = H
    key, k1, k2 = jax.random.split(key, 3)
    return dict(layers=layers,
                lin_w=0.1 * jax.random.normal(k1, (1, H), jnp.float32),
                lin_b=0.1 * jax.random.normal(k2, (1,), jnp.float32))


def ref_forward(x_bcs, params, padding, eps=1e-5):
    """Pure-JAX reference mirroring the PyTorch module (eval-mode BatchNorm)."""
    B = x_bcs.shape[0]
    out = x_bcs.astype(jnp.float32)
    for layer in params["layers"]:
        W = layer["conv_w"][:, :, padding]
        H = W.shape[0] // 4
        cin = out.shape[1]
        Wx, Wh = W[:, :cin], W[:, cin:]
        h = jnp.zeros((B, H), jnp.float32)
        c = jnp.zeros((B, H), jnp.float32)
        hs = []
        for t in range(out.shape[2]):
            z = out[:, :, t] @ Wx.T + h @ Wh.T + layer["conv_b"]
            i = jax.nn.sigmoid(z[:, :H]); f = jax.nn.sigmoid(z[:, H:2 * H])
            o = jax.nn.sigmoid(z[:, 2 * H:3 * H]); g = jnp.tanh(z[:, 3 * H:])
            c = f * c + i * g
            h = o * jnp.tanh(c)
            hs.append(h)
        seq = jnp.stack(hs, axis=2)                        # (B, H, S)
        scale = layer["gamma"] / jnp.sqrt(layer["rvar"] + eps)
        shift = layer["beta"] - layer["rmean"] * scale
        out = seq * scale[None, :, None] + shift[None, :, None]
    logits = out[:, :, -1] @ params["lin_w"].T + params["lin_b"]
    return jax.nn.sigmoid(logits)


# ----------------------------------- main ----------------------------------- #

if __name__ == "__main__":
    B, C, S = 2, 4, 8            # batch, num_channels, seq_len
    H, K, P, L = 32, 3, 1, 2     # num_kernels, kernel_size, padding, num_layers

    key = jax.random.PRNGKey(0)
    kx, kp = jax.random.split(key)
    x = jax.random.normal(kx, (B, C, S), jnp.float32)
    params = init_params(kp, C, H, K, L)

    out = conv_lstm_travel_time(x, params, P)
    out = jax.block_until_ready(out)

    ref = ref_forward(x, params, P)
    assert out.shape == (B, 1)
    assert jnp.allclose(out, ref, atol=1e-4, rtol=1e-4), (out, ref)
    print("KERNEL_OK")
</pallas_src>

<mosaic_0001>
module attributes {stable_mosaic.version = 11 : i64} {
  func.func @kernel(%arg0: i32, %arg1: memref<16x32xf32, #tpu.memory_space<vmem>>, %arg2: memref<2x64x128xf32, #tpu.memory_space<vmem>>, %arg3: memref<2x1x128xf32, #tpu.memory_space<vmem>>, %arg4: memref<1x32xf32, #tpu.memory_space<vmem>>, %arg5: memref<1x1xf32, #tpu.memory_space<vmem>>, %arg6: memref<2x1xf32, #tpu.memory_space<vmem>>) attributes {dimension_semantics = [#tpu.dimension_semantics<arbitrary>], iteration_bounds = array<i64: 1>, scalar_prefetch = 0 : i64, scratch_operands = 0 : i64, tpu.core_type = #tpu.core_type<tc>, window_params = [{pipeline_mode = #tpu.pipeline_mode<synchronous>, transform_indices = @transform_0, window_bounds = array<i64: 16, 32>}, {pipeline_mode = #tpu.pipeline_mode<synchronous>, transform_indices = @transform_1, window_bounds = array<i64: 2, 64, 128>}, {pipeline_mode = #tpu.pipeline_mode<synchronous>, transform_indices = @transform_2, window_bounds = array<i64: 2, 1, 128>}, {pipeline_mode = #tpu.pipeline_mode<synchronous>, transform_indices = @transform_3, window_bounds = array<i64: 1, 32>}, {pipeline_mode = #tpu.pipeline_mode<synchronous>, transform_indices = @transform_4, window_bounds = array<i64: 1, 1>}, {pipeline_mode = #tpu.pipeline_mode<synchronous>, transform_indices = @transform_5, window_bounds = array<i64: 2, 1>}]} {
    %c0 = arith.constant 0 : index
    %c0_0 = arith.constant 0 : index
    %0 = vector.load %arg1[%c0, %c0_0] : memref<16x32xf32, #tpu.memory_space<vmem>>, vector<16x32xf32>
    %c0_1 = arith.constant 0 : index
    %c0_2 = arith.constant 0 : index
    %c0_3 = arith.constant 0 : index
    %1 = vector.load %arg2[%c0_1, %c0_2, %c0_3] : memref<2x64x128xf32, #tpu.memory_space<vmem>>, vector<1x32x128xf32>
    %2 = vector.shape_cast %1 : vector<1x32x128xf32> to vector<32x128xf32>
    %c0_4 = arith.constant 0 : index
    %c32 = arith.constant 32 : index
    %c0_5 = arith.constant 0 : index
    %3 = vector.load %arg2[%c0_4, %c32, %c0_5] : memref<2x64x128xf32, #tpu.memory_space<vmem>>, vector<1x32x128xf32>
    %4 = vector.shape_cast %3 : vector<1x32x128xf32> to vector<32x128xf32>
    %c0_6 = arith.constant 0 : index
    %c0_7 = arith.constant 0 : index
    %c0_8 = arith.constant 0 : index
    %5 = vector.load %arg3[%c0_6, %c0_7, %c0_8] : memref<2x1x128xf32, #tpu.memory_space<vmem>>, vector<1x1x128xf32>
    %6 = vector.shape_cast %5 : vector<1x1x128xf32> to vector<1x128xf32>
    %cst = arith.constant dense<0.000000e+00> : vector<16x128xf32>
    %7 = tpu.matmul %0, %2, %cst {dimension_numbers = #tpu.dot_dimension_numbers<[1], [0], [0], [1], [0, 0, 1, 1], [], []>} : vector<16x32xf32>, vector<32x128xf32>, vector<16x128xf32> -> vector<16x128xf32>
    %8 = vector.broadcast %6 : vector<1x128xf32> to vector<16x128xf32>
    %9 = arith.addf %7, %8 : vector<16x128xf32>
    %cst_9 = arith.constant 0.000000e+00 : f32
    %10 = vector.broadcast %cst_9 : f32 to vector<2x32xf32>
    %cst_10 = arith.constant 0.000000e+00 : f32
    %11 = vector.broadcast %cst_10 : f32 to vector<2x32xf32>
    %12 = vector.extract_strided_slice %9 {offsets = [0, 0], sizes = [2, 128], strides = [1, 1]} : vector<16x128xf32> to vector<2x128xf32>
    %cst_11 = arith.constant dense<0.000000e+00> : vector<2x128xf32>
    %13 = tpu.matmul %10, %4, %cst_11 {dimension_numbers = #tpu.dot_dimension_numbers<[1], [0], [0], [1], [0, 0, 1, 1], [], []>} : vector<2x32xf32>, vector<32x128xf32>, vector<2x128xf32> -> vector<2x128xf32>
    %14 = arith.addf %12, %13 : vector<2x128xf32>
    %15 = vector.extract_strided_slice %14 {offsets = [0, 0], sizes = [2, 96], strides = [1, 1]} : vector<2x128xf32> to vector<2x96xf32>
    %16 = arith.negf %15 : vector<2x96xf32>
    %17 = math.exp %16 : vector<2x96xf32>
    %cst_12 = arith.constant 1.000000e+00 : f32
    %18 = vector.broadcast %cst_12 : f32 to vector<2x96xf32>
    %19 = arith.addf %18, %17 : vector<2x96xf32>
    %20 = arith.divf %18, %19 : vector<2x96xf32>
    %21 = vector.extract_strided_slice %14 {offsets = [0, 96], sizes = [2, 32], strides = [1, 1]} : vector<2x128xf32> to vector<2x32xf32>
    %22 = math.tanh %21 : vector<2x32xf32>
    %23 = vector.extract_strided_slice %20 {offsets = [0, 0], sizes = [2, 32], strides = [1, 1]} : vector<2x96xf32> to vector<2x32xf32>
    %24 = vector.extract_strided_slice %20 {offsets = [0, 32], sizes = [2, 32], strides = [1, 1]} : vector<2x96xf32> to vector<2x32xf32>
    %25 = vector.extract_strided_slice %20 {offsets = [0, 64], sizes = [2, 32], strides = [1, 1]} : vector<2x96xf32> to vector<2x32xf32>
    %26 = arith.mulf %24, %11 : vector<2x32xf32>
    %27 = arith.mulf %23, %22 : vector<2x32xf32>
    %28 = arith.addf %26, %27 : vector<2x32xf32>
    %29 = math.tanh %28 : vector<2x32xf32>
    %30 = arith.mulf %25, %29 : vector<2x32xf32>
    %31 = vector.extract_strided_slice %9 {offsets = [2, 0], sizes = [2, 128], strides = [1, 1]} : vector<16x128xf32> to vector<2x128xf32>
    %cst_13 = arith.constant dense<0.000000e+00> : vector<2x128xf32>
    %32 = tpu.matmul %30, %4, %cst_13 {dimension_numbers = #tpu.dot_dimension_numbers<[1], [0], [0], [1], [0, 0, 1, 1], [], []>} : vector<2x32xf32>, vector<32x128xf32>, vector<2x128xf32> -> vector<2x128xf32>
    %33 = arith.addf %31, %32 : vector<2x128xf32>
    %34 = vector.extract_strided_slice %33 {offsets = [0, 0], sizes = [2, 96], strides = [1, 1]} : vector<2x128xf32> to vector<2x96xf32>
    %35 = arith.negf %34 : vector<2x96xf32>
    %36 = math.exp %35 : vector<2x96xf32>
    %cst_14 = arith.constant 1.000000e+00 : f32
    %37 = vector.broadcast %cst_14 : f32 to vector<2x96xf32>
    %38 = arith.addf %37, %36 : vector<2x96xf32>
    %39 = arith.divf %37, %38 : vector<2x96xf32>
    %40 = vector.extract_strided_slice %33 {offsets = [0, 96], sizes = [2, 32], strides = [1, 1]} : vector<2x128xf32> to vector<2x32xf32>
    %41 = math.tanh %40 : vector<2x32xf32>
    %42 = vector.extract_strided_slice %39 {offsets = [0, 0], sizes = [2, 32], strides = [1, 1]} : vector<2x96xf32> to vector<2x32xf32>
    %43 = vector.extract_strided_slice %39 {offsets = [0, 32], sizes = [2, 32], strides = [1, 1]} : vector<2x96xf32> to vector<2x32xf32>
    %44 = vector.extract_strided_slice %39 {offsets = [0, 64], sizes = [2, 32], strides = [1, 1]} : vector<2x96xf32> to vector<2x32xf32>
    %45 = arith.mulf %43, %28 : vector<2x32xf32>
    %46 = arith.mulf %42, %41 : vector<2x32xf32>
    %47 = arith.addf %45, %46 : vector<2x32xf32>
    %48 = math.tanh %47 : vector<2x32xf32>
    %49 = arith.mulf %44, %48 : vector<2x32xf32>
    %50 = vector.extract_strided_slice %9 {offsets = [4, 0], sizes = [2, 128], strides = [1, 1]} : vector<16x128xf32> to vector<2x128xf32>
    %cst_15 = arith.constant dense<0.000000e+00> : vector<2x128xf32>
    %51 = tpu.matmul %49, %4, %cst_15 {dimension_numbers = #tpu.dot_dimension_numbers<[1], [0], [0], [1], [0, 0, 1, 1], [], []>} : vector<2x32xf32>, vector<32x128xf32>, vector<2x128xf32> -> vector<2x128xf32>
    %52 = arith.addf %50, %51 : vector<2x128xf32>
    %53 = vector.extract_strided_slice %52 {offsets = [0, 0], sizes = [2, 96], strides = [1, 1]} : vector<2x128xf32> to vector<2x96xf32>
    %54 = arith.negf %53 : vector<2x96xf32>
    %55 = math.exp %54 : vector<2x96xf32>
    %cst_16 = arith.constant 1.000000e+00 : f32
    %56 = vector.broadcast %cst_16 : f32 to vector<2x96xf32>
    %57 = arith.addf %56, %55 : vector<2x96xf32>
    %58 = arith.divf %56, %57 : vector<2x96xf32>
    %59 = vector.extract_strided_slice %52 {offsets = [0, 96], sizes = [2, 32], strides = [1, 1]} : vector<2x128xf32> to vector<2x32xf32>
    %60 = math.tanh %59 : vector<2x32xf32>
    %61 = vector.extract_strided_slice %58 {offsets = [0, 0], sizes = [2, 32], strides = [1, 1]} : vector<2x96xf32> to vector<2x32xf32>
    %62 = vector.extract_strided_slice %58 {offsets = [0, 32], sizes = [2, 32], strides = [1, 1]} : vector<2x96xf32> to vector<2x32xf32>
    %63 = vector.extract_strided_slice %58 {offsets = [0, 64], sizes = [2, 32], strides = [1, 1]} : vector<2x96xf32> to vector<2x32xf32>
    %64 = arith.mulf %62, %47 : vector<2x32xf32>
    %65 = arith.mulf %61, %60 : vector<2x32xf32>
    %66 = arith.addf %64, %65 : vector<2x32xf32>
    %67 = math.tanh %66 : vector<2x32xf32>
    %68 = arith.mulf %63, %67 : vector<2x32xf32>
    %69 = vector.extract_strided_slice %9 {offsets = [6, 0], sizes = [2, 128], strides = [1, 1]} : vector<16x128xf32> to vector<2x128xf32>
    %cst_17 = arith.constant dense<0.000000e+00> : vector<2x128xf32>
    %70 = tpu.matmul %68, %4, %cst_17 {dimension_numbers = #tpu.dot_dimension_numbers<[1], [0], [0], [1], [0, 0, 1, 1], [], []>} : vector<2x32xf32>, vector<32x128xf32>, vector<2x128xf32> -> vector<2x128xf32>
    %71 = arith.addf %69, %70 : vector<2x128xf32>
    %72 = vector.extract_strided_slice %71 {offsets = [0, 0], sizes = [2, 96], strides = [1, 1]} : vector<2x128xf32> to vector<2x96xf32>
    %73 = arith.negf %72 : vector<2x96xf32>
    %74 = math.exp %73 : vector<2x96xf32>
    %cst_18 = arith.constant 1.000000e+00 : f32
    %75 = vector.broadcast %cst_18 : f32 to vector<2x96xf32>
    %76 = arith.addf %75, %74 : vector<2x96xf32>
    %77 = arith.divf %75, %76 : vector<2x96xf32>
    %78 = vector.extract_strided_slice %71 {offsets = [0, 96], sizes = [2, 32], strides = [1, 1]} : vector<2x128xf32> to vector<2x32xf32>
    %79 = math.tanh %78 : vector<2x32xf32>
    %80 = vector.extract_strided_slice %77 {offsets = [0, 0], sizes = [2, 32], strides = [1, 1]} : vector<2x96xf32> to vector<2x32xf32>
    %81 = vector.extract_strided_slice %77 {offsets = [0, 32], sizes = [2, 32], strides = [1, 1]} : vector<2x96xf32> to vector<2x32xf32>
    %82 = vector.extract_strided_slice %77 {offsets = [0, 64], sizes = [2, 32], strides = [1, 1]} : vector<2x96xf32> to vector<2x32xf32>
    %83 = arith.mulf %81, %66 : vector<2x32xf32>
    %84 = arith.mulf %80, %79 : vector<2x32xf32>
    %85 = arith.addf %83, %84 : vector<2x32xf32>
    %86 = math.tanh %85 : vector<2x32xf32>
    %87 = arith.mulf %82, %86 : vector<2x32xf32>
    %88 = vector.extract_strided_slice %9 {offsets = [8, 0], sizes = [2, 128], strides = [1, 1]} : vector<16x128xf32> to vector<2x128xf32>
    %cst_19 = arith.constant dense<0.000000e+00> : vector<2x128xf32>
    %89 = tpu.matmul %87, %4, %cst_19 {dimension_numbers = #tpu.dot_dimension_numbers<[1], [0], [0], [1], [0, 0, 1, 1], [], []>} : vector<2x32xf32>, vector<32x128xf32>, vector<2x128xf32> -> vector<2x128xf32>
    %90 = arith.addf %88, %89 : vector<2x128xf32>
    %91 = vector.extract_strided_slice %90 {offsets = [0, 0], sizes = [2, 96], strides = [1, 1]} : vector<2x128xf32> to vector<2x96xf32>
    %92 = arith.negf %91 : vector<2x96xf32>
    %93 = math.exp %92 : vector<2x96xf32>
    %cst_20 = arith.constant 1.000000e+00 : f32
    %94 = vector.broadcast %cst_20 : f32 to vector<2x96xf32>
    %95 = arith.addf %94, %93 : vector<2x96xf32>
    %96 = arith.divf %94, %95 : vector<2x96xf32>
    %97 = vector.extract_strided_slice %90 {offsets = [0, 96], sizes = [2, 32], strides = [1, 1]} : vector<2x128xf32> to vector<2x32xf32>
    %98 = math.tanh %97 : vector<2x32xf32>
    %99 = vector.extract_strided_slice %96 {offsets = [0, 0], sizes = [2, 32], strides = [1, 1]} : vector<2x96xf32> to vector<2x32xf32>
    %100 = vector.extract_strided_slice %96 {offsets = [0, 32], sizes = [2, 32], strides = [1, 1]} : vector<2x96xf32> to vector<2x32xf32>
    %101 = vector.extract_strided_slice %96 {offsets = [0, 64], sizes = [2, 32], strides = [1, 1]} : vector<2x96xf32> to vector<2x32xf32>
    %102 = arith.mulf %100, %85 : vector<2x32xf32>
    %103 = arith.mulf %99, %98 : vector<2x32xf32>
    %104 = arith.addf %102, %103 : vector<2x32xf32>
    %105 = math.tanh %104 : vector<2x32xf32>
    %106 = arith.mulf %101, %105 : vector<2x32xf32>
    %107 = vector.extract_strided_slice %9 {offsets = [10, 0], sizes = [2, 128], strides = [1, 1]} : vector<16x128xf32> to vector<2x128xf32>
    %cst_21 = arith.constant dense<0.000000e+00> : vector<2x128xf32>
    %108 = tpu.matmul %106, %4, %cst_21 {dimension_numbers = #tpu.dot_dimension_numbers<[1], [0], [0], [1], [0, 0, 1, 1], [], []>} : vector<2x32xf32>, vector<32x128xf32>, vector<2x128xf32> -> vector<2x128xf32>
    %109 = arith.addf %107, %108 : vector<2x128xf32>
    %110 = vector.extract_strided_slice %109 {offsets = [0, 0], sizes = [2, 96], strides = [1, 1]} : vector<2x128xf32> to vector<2x96xf32>
    %111 = arith.negf %110 : vector<2x96xf32>
    %112 = math.exp %111 : vector<2x96xf32>
    %cst_22 = arith.constant 1.000000e+00 : f32
    %113 = vector.broadcast %cst_22 : f32 to vector<2x96xf32>
    %114 = arith.addf %113, %112 : vector<2x96xf32>
    %115 = arith.divf %113, %114 : vector<2x96xf32>
    %116 = vector.extract_strided_slice %109 {offsets = [0, 96], sizes = [2, 32], strides = [1, 1]} : vector<2x128xf32> to vector<2x32xf32>
    %117 = math.tanh %116 : vector<2x32xf32>
    %118 = vector.extract_strided_slice %115 {offsets = [0, 0], sizes = [2, 32], strides = [1, 1]} : vector<2x96xf32> to vector<2x32xf32>
    %119 = vector.extract_strided_slice %115 {offsets = [0, 32], sizes = [2, 32], strides = [1, 1]} : vector<2x96xf32> to vector<2x32xf32>
    %120 = vector.extract_strided_slice %115 {offsets = [0, 64], sizes = [2, 32], strides = [1, 1]} : vector<2x96xf32> to vector<2x32xf32>
    %121 = arith.mulf %119, %104 : vector<2x32xf32>
    %122 = arith.mulf %118, %117 : vector<2x32xf32>
    %123 = arith.addf %121, %122 : vector<2x32xf32>
    %124 = math.tanh %123 : vector<2x32xf32>
    %125 = arith.mulf %120, %124 : vector<2x32xf32>
    %126 = vector.extract_strided_slice %9 {offsets = [12, 0], sizes = [2, 128], strides = [1, 1]} : vector<16x128xf32> to vector<2x128xf32>
    %cst_23 = arith.constant dense<0.000000e+00> : vector<2x128xf32>
    %127 = tpu.matmul %125, %4, %cst_23 {dimension_numbers = #tpu.dot_dimension_numbers<[1], [0], [0], [1], [0, 0, 1, 1], [], []>} : vector<2x32xf32>, vector<32x128xf32>, vector<2x128xf32> -> vector<2x128xf32>
    %128 = arith.addf %126, %127 : vector<2x128xf32>
    %129 = vector.extract_strided_slice %128 {offsets = [0, 0], sizes = [2, 96], strides = [1, 1]} : vector<2x128xf32> to vector<2x96xf32>
    %130 = arith.negf %129 : vector<2x96xf32>
    %131 = math.exp %130 : vector<2x96xf32>
    %cst_24 = arith.constant 1.000000e+00 : f32
    %132 = vector.broadcast %cst_24 : f32 to vector<2x96xf32>
    %133 = arith.addf %132, %131 : vector<2x96xf32>
    %134 = arith.divf %132, %133 : vector<2x96xf32>
    %135 = vector.extract_strided_slice %128 {offsets = [0, 96], sizes = [2, 32], strides = [1, 1]} : vector<2x128xf32> to vector<2x32xf32>
    %136 = math.tanh %135 : vector<2x32xf32>
    %137 = vector.extract_strided_slice %134 {offsets = [0, 0], sizes = [2, 32], strides = [1, 1]} : vector<2x96xf32> to vector<2x32xf32>
    %138 = vector.extract_strided_slice %134 {offsets = [0, 32], sizes = [2, 32], strides = [1, 1]} : vector<2x96xf32> to vector<2x32xf32>
    %139 = vector.extract_strided_slice %134 {offsets = [0, 64], sizes = [2, 32], strides = [1, 1]} : vector<2x96xf32> to vector<2x32xf32>
    %140 = arith.mulf %138, %123 : vector<2x32xf32>
    %141 = arith.mulf %137, %136 : vector<2x32xf32>
    %142 = arith.addf %140, %141 : vector<2x32xf32>
    %143 = math.tanh %142 : vector<2x32xf32>
    %144 = arith.mulf %139, %143 : vector<2x32xf32>
    %145 = vector.extract_strided_slice %9 {offsets = [14, 0], sizes = [2, 128], strides = [1, 1]} : vector<16x128xf32> to vector<2x128xf32>
    %cst_25 = arith.constant dense<0.000000e+00> : vector<2x128xf32>
    %146 = tpu.matmul %144, %4, %cst_25 {dimension_numbers = #tpu.dot_dimension_numbers<[1], [0], [0], [1], [0, 0, 1, 1], [], []>} : vector<2x32xf32>, vector<32x128xf32>, vector<2x128xf32> -> vector<2x128xf32>
    %147 = arith.addf %145, %146 : vector<2x128xf32>
    %148 = vector.extract_strided_slice %147 {offsets = [0, 0], sizes = [2, 96], strides = [1, 1]} : vector<2x128xf32> to vector<2x96xf32>
    %149 = arith.negf %148 : vector<2x96xf32>
    %150 = math.exp %149 : vector<2x96xf32>
    %cst_26 = arith.constant 1.000000e+00 : f32
    %151 = vector.broadcast %cst_26 : f32 to vector<2x96xf32>
    %152 = arith.addf %151, %150 : vector<2x96xf32>
    %153 = arith.divf %151, %152 : vector<2x96xf32>
    %154 = vector.extract_strided_slice %147 {offsets = [0, 96], sizes = [2, 32], strides = [1, 1]} : vector<2x128xf32> to vector<2x32xf32>
    %155 = math.tanh %154 : vector<2x32xf32>
    %156 = vector.extract_strided_slice %153 {offsets = [0, 0], sizes = [2, 32], strides = [1, 1]} : vector<2x96xf32> to vector<2x32xf32>
    %157 = vector.extract_strided_slice %153 {offsets = [0, 32], sizes = [2, 32], strides = [1, 1]} : vector<2x96xf32> to vector<2x32xf32>
    %158 = vector.extract_strided_slice %153 {offsets = [0, 64], sizes = [2, 32], strides = [1, 1]} : vector<2x96xf32> to vector<2x32xf32>
    %159 = arith.mulf %157, %142 : vector<2x32xf32>
    %160 = arith.mulf %156, %155 : vector<2x32xf32>
    %161 = arith.addf %159, %160 : vector<2x32xf32>
    %162 = math.tanh %161 : vector<2x32xf32>
    %163 = arith.mulf %158, %162 : vector<2x32xf32>
    %164 = tpu.concatenate %30, %49, %68, %87, %106, %125, %144, %163 in 0 : vector<2x32xf32>, vector<2x32xf32>, vector<2x32xf32>, vector<2x32xf32>, vector<2x32xf32>, vector<2x32xf32>, vector<2x32xf32>, vector<2x32xf32> -> vector<16x32xf32>
    %c1 = arith.constant 1 : index
    %c0_27 = arith.constant 0 : index
    %c0_28 = arith.constant 0 : index
    %165 = vector.load %arg2[%c1, %c0_27, %c0_28] : memref<2x64x128xf32, #tpu.memory_space<vmem>>, vector<1x32x128xf32>
    %166 = vector.shape_cast %165 : vector<1x32x128xf32> to vector<32x128xf32>
    %c1_29 = arith.constant 1 : index
    %c32_30 = arith.constant 32 : index
    %c0_31 = arith.constant 0 : index
    %167 = vector.load %arg2[%c1_29, %c32_30, %c0_31] : memref<2x64x128xf32, #tpu.memory_space<vmem>>, vector<1x32x128xf32>
    %168 = vector.shape_cast %167 : vector<1x32x128xf32> to vector<32x128xf32>
    %c1_32 = arith.constant 1 : index
    %c0_33 = arith.constant 0 : index
    %c0_34 = arith.constant 0 : index
    %169 = vector.load %arg3[%c1_32, %c0_33, %c0_34] : memref<2x1x128xf32, #tpu.memory_space<vmem>>, vector<1x1x128xf32>
    %170 = vector.shape_cast %169 : vector<1x1x128xf32> to vector<1x128xf32>
    %cst_35 = arith.constant dense<0.000000e+00> : vector<16x128xf32>
    %171 = tpu.matmul %164, %166, %cst_35 {dimension_numbers = #tpu.dot_dimension_numbers<[1], [0], [0], [1], [0, 0, 1, 1], [], []>} : vector<16x32xf32>, vector<32x128xf32>, vector<16x128xf32> -> vector<16x128xf32>
    %172 = vector.broadcast %170 : vector<1x128xf32> to vector<16x128xf32>
    %173 = arith.addf %171, %172 : vector<16x128xf32>
    %cst_36 = arith.constant 0.000000e+00 : f32
    %174 = vector.broadcast %cst_36 : f32 to vector<2x32xf32>
    %cst_37 = arith.constant 0.000000e+00 : f32
    %175 = vector.broadcast %cst_37 : f32 to vector<2x32xf32>
    %176 = vector.extract_strided_slice %173 {offsets = [0, 0], sizes = [2, 128], strides = [1, 1]} : vector<16x128xf32> to vector<2x128xf32>
    %cst_38 = arith.constant dense<0.000000e+00> : vector<2x128xf32>
    %177 = tpu.matmul %174, %168, %cst_38 {dimension_numbers = #tpu.dot_dimension_numbers<[1], [0], [0], [1], [0, 0, 1, 1], [], []>} : vector<2x32xf32>, vector<32x128xf32>, vector<2x128xf32> -> vector<2x128xf32>
    %178 = arith.addf %176, %177 : vector<2x128xf32>
    %179 = vector.extract_strided_slice %178 {offsets = [0, 0], sizes = [2, 96], strides = [1, 1]} : vector<2x128xf32> to vector<2x96xf32>
    %180 = arith.negf %179 : vector<2x96xf32>
    %181 = math.exp %180 : vector<2x96xf32>
    %cst_39 = arith.constant 1.000000e+00 : f32
    %182 = vector.broadcast %cst_39 : f32 to vector<2x96xf32>
    %183 = arith.addf %182, %181 : vector<2x96xf32>
    %184 = arith.divf %182, %183 : vector<2x96xf32>
    %185 = vector.extract_strided_slice %178 {offsets = [0, 96], sizes = [2, 32], strides = [1, 1]} : vector<2x128xf32> to vector<2x32xf32>
    %186 = math.tanh %185 : vector<2x32xf32>
    %187 = vector.extract_strided_slice %184 {offsets = [0, 0], sizes = [2, 32], strides = [1, 1]} : vector<2x96xf32> to vector<2x32xf32>
    %188 = vector.extract_strided_slice %184 {offsets = [0, 32], sizes = [2, 32], strides = [1, 1]} : vector<2x96xf32> to vector<2x32xf32>
    %189 = vector.extract_strided_slice %184 {offsets = [0, 64], sizes = [2, 32], strides = [1, 1]} : vector<2x96xf32> to vector<2x32xf32>
    %190 = arith.mulf %188, %175 : vector<2x32xf32>
    %191 = arith.mulf %187, %186 : vector<2x32xf32>
    %192 = arith.addf %190, %191 : vector<2x32xf32>
    %193 = math.tanh %192 : vector<2x32xf32>
    %194 = arith.mulf %189, %193 : vector<2x32xf32>
    %195 = vector.extract_strided_slice %173 {offsets = [2, 0], sizes = [2, 128], strides = [1, 1]} : vector<16x128xf32> to vector<2x128xf32>
    %cst_40 = arith.constant dense<0.000000e+00> : vector<2x128xf32>
    %196 = tpu.matmul %194, %168, %cst_40 {dimension_numbers = #tpu.dot_dimension_numbers<[1], [0], [0], [1], [0, 0, 1, 1], [], []>} : vector<2x32xf32>, vector<32x128xf32>, vector<2x128xf32> -> vector<2x128xf32>
    %197 = arith.addf %195, %196 : vector<2x128xf32>
    %198 = vector.extract_strided_slice %197 {offsets = [0, 0], sizes = [2, 96], strides = [1, 1]} : vector<2x128xf32> to vector<2x96xf32>
    %199 = arith.negf %198 : vector<2x96xf32>
    %200 = math.exp %199 : vector<2x96xf32>
    %cst_41 = arith.constant 1.000000e+00 : f32
    %201 = vector.broadcast %cst_41 : f32 to vector<2x96xf32>
    %202 = arith.addf %201, %200 : vector<2x96xf32>
    %203 = arith.divf %201, %202 : vector<2x96xf32>
    %204 = vector.extract_strided_slice %197 {offsets = [0, 96], sizes = [2, 32], strides = [1, 1]} : vector<2x128xf32> to vector<2x32xf32>
    %205 = math.tanh %204 : vector<2x32xf32>
    %206 = vector.extract_strided_slice %203 {offsets = [0, 0], sizes = [2, 32], strides = [1, 1]} : vector<2x96xf32> to vector<2x32xf32>
    %207 = vector.extract_strided_slice %203 {offsets = [0, 32], sizes = [2, 32], strides = [1, 1]} : vector<2x96xf32> to vector<2x32xf32>
    %208 = vector.extract_strided_slice %203 {offsets = [0, 64], sizes = [2, 32], strides = [1, 1]} : vector<2x96xf32> to vector<2x32xf32>
    %209 = arith.mulf %207, %192 : vector<2x32xf32>
    %210 = arith.mulf %206, %205 : vector<2x32xf32>
    %211 = arith.addf %209, %210 : vector<2x32xf32>
    %212 = math.tanh %211 : vector<2x32xf32>
    %213 = arith.mulf %208, %212 : vector<2x32xf32>
    %214 = vector.extract_strided_slice %173 {offsets = [4, 0], sizes = [2, 128], strides = [1, 1]} : vector<16x128xf32> to vector<2x128xf32>
    %cst_42 = arith.constant dense<0.000000e+00> : vector<2x128xf32>
    %215 = tpu.matmul %213, %168, %cst_42 {dimension_numbers = #tpu.dot_dimension_numbers<[1], [0], [0], [1], [0, 0, 1, 1], [], []>} : vector<2x32xf32>, vector<32x128xf32>, vector<2x128xf32> -> vector<2x128xf32>
    %216 = arith.addf %214, %215 : vector<2x128xf32>
    %217 = vector.extract_strided_slice %216 {offsets = [0, 0], sizes = [2, 96], strides = [1, 1]} : vector<2x128xf32> to vector<2x96xf32>
    %218 = arith.negf %217 : vector<2x96xf32>
    %219 = math.exp %218 : vector<2x96xf32>
    %cst_43 = arith.constant 1.000000e+00 : f32
    %220 = vector.broadcast %cst_43 : f32 to vector<2x96xf32>
    %221 = arith.addf %220, %219 : vector<2x96xf32>
    %222 = arith.divf %220, %221 : vector<2x96xf32>
    %223 = vector.extract_strided_slice %216 {offsets = [0, 96], sizes = [2, 32], strides = [1, 1]} : vector<2x128xf32> to vector<2x32xf32>
    %224 = math.tanh %223 : vector<2x32xf32>
    %225 = vector.extract_strided_slice %222 {offsets = [0, 0], sizes = [2, 32], strides = [1, 1]} : vector<2x96xf32> to vector<2x32xf32>
    %226 = vector.extract_strided_slice %222 {offsets = [0, 32], sizes = [2, 32], strides = [1, 1]} : vector<2x96xf32> to vector<2x32xf32>
    %227 = vector.extract_strided_slice %222 {offsets = [0, 64], sizes = [2, 32], strides = [1, 1]} : vector<2x96xf32> to vector<2x32xf32>
    %228 = arith.mulf %226, %211 : vector<2x32xf32>
    %229 = arith.mulf %225, %224 : vector<2x32xf32>
    %230 = arith.addf %228, %229 : vector<2x32xf32>
    %231 = math.tanh %230 : vector<2x32xf32>
    %232 = arith.mulf %227, %231 : vector<2x32xf32>
    %233 = vector.extract_strided_slice %173 {offsets = [6, 0], sizes = [2, 128], strides = [1, 1]} : vector<16x128xf32> to vector<2x128xf32>
    %cst_44 = arith.constant dense<0.000000e+00> : vector<2x128xf32>
    %234 = tpu.matmul %232, %168, %cst_44 {dimension_numbers = #tpu.dot_dimension_numbers<[1], [0], [0], [1], [0, 0, 1, 1], [], []>} : vector<2x32xf32>, vector<32x128xf32>, vector<2x128xf32> -> vector<2x128xf32>
    %235 = arith.addf %233, %234 : vector<2x128xf32>
    %236 = vector.extract_strided_slice %235 {offsets = [0, 0], sizes = [2, 96], strides = [1, 1]} : vector<2x128xf32> to vector<2x96xf32>
    %237 = arith.negf %236 : vector<2x96xf32>
    %238 = math.exp %237 : vector<2x96xf32>
    %cst_45 = arith.constant 1.000000e+00 : f32
    %239 = vector.broadcast %cst_45 : f32 to vector<2x96xf32>
    %240 = arith.addf %239, %238 : vector<2x96xf32>
    %241 = arith.divf %239, %240 : vector<2x96xf32>
    %242 = vector.extract_strided_slice %235 {offsets = [0, 96], sizes = [2, 32], strides = [1, 1]} : vector<2x128xf32> to vector<2x32xf32>
    %243 = math.tanh %242 : vector<2x32xf32>
    %244 = vector.extract_strided_slice %241 {offsets = [0, 0], sizes = [2, 32], strides = [1, 1]} : vector<2x96xf32> to vector<2x32xf32>
    %245 = vector.extract_strided_slice %241 {offsets = [0, 32], sizes = [2, 32], strides = [1, 1]} : vector<2x96xf32> to vector<2x32xf32>
    %246 = vector.extract_strided_slice %241 {offsets = [0, 64], sizes = [2, 32], strides = [1, 1]} : vector<2x96xf32> to vector<2x32xf32>
    %247 = arith.mulf %245, %230 : vector<2x32xf32>
    %248 = arith.mulf %244, %243 : vector<2x32xf32>
    %249 = arith.addf %247, %248 : vector<2x32xf32>
    %250 = math.tanh %249 : vector<2x32xf32>
    %251 = arith.mulf %246, %250 : vector<2x32xf32>
    %252 = vector.extract_strided_slice %173 {offsets = [8, 0], sizes = [2, 128], strides = [1, 1]} : vector<16x128xf32> to vector<2x128xf32>
    %cst_46 = arith.constant dense<0.000000e+00> : vector<2x128xf32>
    %253 = tpu.matmul %251, %168, %cst_46 {dimension_numbers = #tpu.dot_dimension_numbers<[1], [0], [0], [1], [0, 0, 1, 1], [], []>} : vector<2x32xf32>, vector<32x128xf32>, vector<2x128xf32> -> vector<2x128xf32>
    %254 = arith.addf %252, %253 : vector<2x128xf32>
    %255 = vector.extract_strided_slice %254 {offsets = [0, 0], sizes = [2, 96], strides = [1, 1]} : vector<2x128xf32> to vector<2x96xf32>
    %256 = arith.negf %255 : vector<2x96xf32>
    %257 = math.exp %256 : vector<2x96xf32>
    %cst_47 = arith.constant 1.000000e+00 : f32
    %258 = vector.broadcast %cst_47 : f32 to vector<2x96xf32>
    %259 = arith.addf %258, %257 : vector<2x96xf32>
    %260 = arith.divf %258, %259 : vector<2x96xf32>
    %261 = vector.extract_strided_slice %254 {offsets = [0, 96], sizes = [2, 32], strides = [1, 1]} : vector<2x128xf32> to vector<2x32xf32>
    %262 = math.tanh %261 : vector<2x32xf32>
    %263 = vector.extract_strided_slice %260 {offsets = [0, 0], sizes = [2, 32], strides = [1, 1]} : vector<2x96xf32> to vector<2x32xf32>
    %264 = vector.extract_strided_slice %260 {offsets = [0, 32], sizes = [2, 32], strides = [1, 1]} : vector<2x96xf32> to vector<2x32xf32>
    %265 = vector.extract_strided_slice %260 {offsets = [0, 64], sizes = [2, 32], strides = [1, 1]} : vector<2x96xf32> to vector<2x32xf32>
    %266 = arith.mulf %264, %249 : vector<2x32xf32>
    %267 = arith.mulf %263, %262 : vector<2x32xf32>
    %268 = arith.addf %266, %267 : vector<2x32xf32>
    %269 = math.tanh %268 : vector<2x32xf32>
    %270 = arith.mulf %265, %269 : vector<2x32xf32>
    %271 = vector.extract_strided_slice %173 {offsets = [10, 0], sizes = [2, 128], strides = [1, 1]} : vector<16x128xf32> to vector<2x128xf32>
    %cst_48 = arith.constant dense<0.000000e+00> : vector<2x128xf32>
    %272 = tpu.matmul %270, %168, %cst_48 {dimension_numbers = #tpu.dot_dimension_numbers<[1], [0], [0], [1], [0, 0, 1, 1], [], []>} : vector<2x32xf32>, vector<32x128xf32>, vector<2x128xf32> -> vector<2x128xf32>
    %273 = arith.addf %271, %272 : vector<2x128xf32>
    %274 = vector.extract_strided_slice %273 {offsets = [0, 0], sizes = [2, 96], strides = [1, 1]} : vector<2x128xf32> to vector<2x96xf32>
    %275 = arith.negf %274 : vector<2x96xf32>
    %276 = math.exp %275 : vector<2x96xf32>
    %cst_49 = arith.constant 1.000000e+00 : f32
    %277 = vector.broadcast %cst_49 : f32 to vector<2x96xf32>
    %278 = arith.addf %277, %276 : vector<2x96xf32>
    %279 = arith.divf %277, %278 : vector<2x96xf32>
    %280 = vector.extract_strided_slice %273 {offsets = [0, 96], sizes = [2, 32], strides = [1, 1]} : vector<2x128xf32> to vector<2x32xf32>
    %281 = math.tanh %280 : vector<2x32xf32>
    %282 = vector.extract_strided_slice %279 {offsets = [0, 0], sizes = [2, 32], strides = [1, 1]} : vector<2x96xf32> to vector<2x32xf32>
    %283 = vector.extract_strided_slice %279 {offsets = [0, 32], sizes = [2, 32], strides = [1, 1]} : vector<2x96xf32> to vector<2x32xf32>
    %284 = vector.extract_strided_slice %279 {offsets = [0, 64], sizes = [2, 32], strides = [1, 1]} : vector<2x96xf32> to vector<2x32xf32>
    %285 = arith.mulf %283, %268 : vector<2x32xf32>
    %286 = arith.mulf %282, %281 : vector<2x32xf32>
    %287 = arith.addf %285, %286 : vector<2x32xf32>
    %288 = math.tanh %287 : vector<2x32xf32>
    %289 = arith.mulf %284, %288 : vector<2x32xf32>
    %290 = vector.extract_strided_slice %173 {offsets = [12, 0], sizes = [2, 128], strides = [1, 1]} : vector<16x128xf32> to vector<2x128xf32>
    %cst_50 = arith.constant dense<0.000000e+00> : vector<2x128xf32>
    %291 = tpu.matmul %289, %168, %cst_50 {dimension_numbers = #tpu.dot_dimension_numbers<[1], [0], [0], [1], [0, 0, 1, 1], [], []>} : vector<2x32xf32>, vector<32x128xf32>, vector<2x128xf32> -> vector<2x128xf32>
    %292 = arith.addf %290, %291 : vector<2x128xf32>
    %293 = vector.extract_strided_slice %292 {offsets = [0, 0], sizes = [2, 96], strides = [1, 1]} : vector<2x128xf32> to vector<2x96xf32>
    %294 = arith.negf %293 : vector<2x96xf32>
    %295 = math.exp %294 : vector<2x96xf32>
    %cst_51 = arith.constant 1.000000e+00 : f32
    %296 = vector.broadcast %cst_51 : f32 to vector<2x96xf32>
    %297 = arith.addf %296, %295 : vector<2x96xf32>
    %298 = arith.divf %296, %297 : vector<2x96xf32>
    %299 = vector.extract_strided_slice %292 {offsets = [0, 96], sizes = [2, 32], strides = [1, 1]} : vector<2x128xf32> to vector<2x32xf32>
    %300 = math.tanh %299 : vector<2x32xf32>
    %301 = vector.extract_strided_slice %298 {offsets = [0, 0], sizes = [2, 32], strides = [1, 1]} : vector<2x96xf32> to vector<2x32xf32>
    %302 = vector.extract_strided_slice %298 {offsets = [0, 32], sizes = [2, 32], strides = [1, 1]} : vector<2x96xf32> to vector<2x32xf32>
    %303 = vector.extract_strided_slice %298 {offsets = [0, 64], sizes = [2, 32], strides = [1, 1]} : vector<2x96xf32> to vector<2x32xf32>
    %304 = arith.mulf %302, %287 : vector<2x32xf32>
    %305 = arith.mulf %301, %300 : vector<2x32xf32>
    %306 = arith.addf %304, %305 : vector<2x32xf32>
    %307 = math.tanh %306 : vector<2x32xf32>
    %308 = arith.mulf %303, %307 : vector<2x32xf32>
    %309 = vector.extract_strided_slice %173 {offsets = [14, 0], sizes = [2, 128], strides = [1, 1]} : vector<16x128xf32> to vector<2x128xf32>
    %cst_52 = arith.constant dense<0.000000e+00> : vector<2x128xf32>
    %310 = tpu.matmul %308, %168, %cst_52 {dimension_numbers = #tpu.dot_dimension_numbers<[1], [0], [0], [1], [0, 0, 1, 1], [], []>} : vector<2x32xf32>, vector<32x128xf32>, vector<2x128xf32> -> vector<2x128xf32>
    %311 = arith.addf %309, %310 : vector<2x128xf32>
    %312 = vector.extract_strided_slice %311 {offsets = [0, 0], sizes = [2, 96], strides = [1, 1]} : vector<2x128xf32> to vector<2x96xf32>
    %313 = arith.negf %312 : vector<2x96xf32>
    %314 = math.exp %313 : vector<2x96xf32>
    %cst_53 = arith.constant 1.000000e+00 : f32
    %315 = vector.broadcast %cst_53 : f32 to vector<2x96xf32>
    %316 = arith.addf %315, %314 : vector<2x96xf32>
    %317 = arith.divf %315, %316 : vector<2x96xf32>
    %318 = vector.extract_strided_slice %311 {offsets = [0, 96], sizes = [2, 32], strides = [1, 1]} : vector<2x128xf32> to vector<2x32xf32>
    %319 = math.tanh %318 : vector<2x32xf32>
    %320 = vector.extract_strided_slice %317 {offsets = [0, 0], sizes = [2, 32], strides = [1, 1]} : vector<2x96xf32> to vector<2x32xf32>
    %321 = vector.extract_strided_slice %317 {offsets = [0, 32], sizes = [2, 32], strides = [1, 1]} : vector<2x96xf32> to vector<2x32xf32>
    %322 = vector.extract_strided_slice %317 {offsets = [0, 64], sizes = [2, 32], strides = [1, 1]} : vector<2x96xf32> to vector<2x32xf32>
    %323 = arith.mulf %321, %306 : vector<2x32xf32>
    %324 = arith.mulf %320, %319 : vector<2x32xf32>
    %325 = arith.addf %323, %324 : vector<2x32xf32>
    %326 = math.tanh %325 : vector<2x32xf32>
    %327 = arith.mulf %322, %326 : vector<2x32xf32>
    %c0_54 = arith.constant 0 : index
    %c0_55 = arith.constant 0 : index
    %328 = vector.load %arg4[%c0_54, %c0_55] : memref<1x32xf32, #tpu.memory_space<vmem>>, vector<1x32xf32>
    %329 = vector.broadcast %328 : vector<1x32xf32> to vector<2x32xf32>
    %330 = arith.mulf %327, %329 : vector<2x32xf32>
    %cst_56 = arith.constant dense<0.000000e+00> : vector<2xf32>
    %331 = vector.multi_reduction <add>, %330, %cst_56 [1] : vector<2x32xf32> to vector<2xf32>
    %332 = vector.shape_cast %331 : vector<2xf32> to vector<2x1xf32>
    %c0_57 = arith.constant 0 : index
    %c0_58 = arith.constant 0 : index
    %333 = vector.load %arg5[%c0_57, %c0_58] : memref<1x1xf32, #tpu.memory_space<vmem>>, vector<1x1xf32>
    %334 = vector.broadcast %333 : vector<1x1xf32> to vector<2x1xf32>
    %335 = arith.addf %332, %334 : vector<2x1xf32>
    %336 = arith.negf %335 : vector<2x1xf32>
    %337 = math.exp %336 : vector<2x1xf32>
    %cst_59 = arith.constant 1.000000e+00 : f32
    %338 = vector.broadcast %cst_59 : f32 to vector<2x1xf32>
    %339 = arith.addf %338, %337 : vector<2x1xf32>
    %340 = arith.divf %338, %339 : vector<2x1xf32>
    %c0_60 = arith.constant 0 : index
    %c0_61 = arith.constant 0 : index
    %341 = vector.load %arg6[%c0_60, %c0_61] : memref<2x1xf32, #tpu.memory_space<vmem>>, vector<2x1xf32>
    tpu.vector_store %arg6[%c0_60, %c0_61], %340 {strides = array<i32>} : memref<2x1xf32, #tpu.memory_space<vmem>>, vector<2x1xf32>,
    return
  }
  func.func @transform_0(%arg0: i32) -> (i32, i32) {
    %c0_i32 = arith.constant 0 : i32
    %c0_i32_0 = arith.constant 0 : i32
    %c0_i32_1 = arith.constant 0 : i32
    return %c0_i32, %c0_i32_0 : i32, i32
  }
  func.func @transform_1(%arg0: i32) -> (i32, i32, i32) {
    %c0_i32 = arith.constant 0 : i32
    %c0_i32_0 = arith.constant 0 : i32
    %c0_i32_1 = arith.constant 0 : i32
    %c0_i32_2 = arith.constant 0 : i32
    return %c0_i32, %c0_i32_0, %c0_i32_1 : i32, i32, i32
  }
  func.func @transform_2(%arg0: i32) -> (i32, i32, i32) {
    %c0_i32 = arith.constant 0 : i32
    %c0_i32_0 = arith.constant 0 : i32
    %c0_i32_1 = arith.constant 0 : i32
    %c0_i32_2 = arith.constant 0 : i32
    return %c0_i32, %c0_i32_0, %c0_i32_1 : i32, i32, i32
  }
  func.func @transform_3(%arg0: i32) -> (i32, i32) {
    %c0_i32 = arith.constant 0 : i32
    %c0_i32_0 = arith.constant 0 : i32
    %c0_i32_1 = arith.constant 0 : i32
    return %c0_i32, %c0_i32_0 : i32, i32
  }
  func.func @transform_4(%arg0: i32) -> (i32, i32) {
    %c0_i32 = arith.constant 0 : i32
    %c0_i32_0 = arith.constant 0 : i32
    %c0_i32_1 = arith.constant 0 : i32
    return %c0_i32, %c0_i32_0 : i32, i32
  }
  func.func @transform_5(%arg0: i32) -> (i32, i32) {
    %c0_i32 = arith.constant 0 : i32
    %c0_i32_0 = arith.constant 0 : i32
    %c0_i32_1 = arith.constant 0 : i32
    return %c0_i32, %c0_i32_0 : i32, i32
  }
}

</mosaic_0001>

<llo_original>
// kernel: tpu_custom_call.1
$region0: #{tpu_custom_call.1}
  #allocation0 [shape = 'u32[]', space=smem, size = 0x4, offset = 0x4, fixed_abs, tag = 'smem constant byte address 0x4 - core index']
  #allocation1 [shape = 'u32[144,128]{1,0:T(1,128)}', space=vmem, size = 0x12000, scoped, tag = 'internal scratch']
  #allocation2 [shape = 'f32[1,1]{1,0:T(1,128)S(1)}', space=vmem, size = 0x200, scoped, tag = 'scoped memory for tpu_custom_call.1']
  %s0 = inlined_call_operand.hbm [shape: f32[16,32], index: 0, kind: input, shape index: {}]
  %s1 = inlined_call_operand.hbm [shape: f32[2,64,128], index: 1, kind: input, shape index: {}]
  %s2 = inlined_call_operand.vmem [shape: f32[2,1,128], index: 2, kind: input, shape index: {}]
  %s3 = inlined_call_operand.vmem [shape: f32[1,32], index: 3, kind: input, shape index: {}]
  %s4 = inlined_call_operand.<no memory space> [shape: f32[1,1], index: 4, kind: input, shape index: {}]
  %s5 = inlined_call_operand.vmem [shape: f32[2,1], index: 5, kind: output, shape index: {}]
  %s6 = sld [smem:[#allocation0]]
  $region38: #{tpu_custom_call.1} parent=0
    _
  %s8 = ssub.s32 1, %s6
  %s9 = scalar_select 0, %s8, %s6
  %v10 = vstv %s4
  %11 = vst [vmem:[#allocation2] sm:$0x1] %v10
  $region1: #{tpu_custom_call.1} parent=0
    #allocation3 [shape = 'u8[8192]{0}', space=vmem, size = 0x2000, scoped, tag = 'input window, operand 0, single buffered']
    #allocation4 [shape = 's32[1]{0}', space=sflag, size = 0x4, scoped, tag = 'scoped memory for tpu_custom_call.1']
    #allocation5 [shape = 'u8[65536]{0}', space=vmem, size = 0x10000, scoped, tag = 'input window, operand 1, single buffered']
    #allocation6 [shape = 's32[1]{0}', space=sflag, size = 0x4, scoped, tag = 'scoped memory for tpu_custom_call.1']
    %12 = vsyncpa [#allocation4], 0
    %13 = vsyncpa [#allocation6], 0
    // Predicated region
    $region2: #{tpu_custom_call.1} parent=1 // pred_check
      _
    $region3: #{tpu_custom_call.1} parent=1 // pred_check_branch
      %15 = sbr.rel (0) target = $region5
    $region4: #{tpu_custom_call.1} parent=1 // pred_region
      %s17 = ssub.s32 256, 256
      %18 = vsyncadd [#allocation4], %s17
      %s19 = sshll.u32 [#allocation3], 4
      %s20 = int_to_ptr.vmem [resolvable:$true] %s19
      %25 = dma.hbm_to_vmem [thread:$0]  %s0, 256, %s20, [#allocation4], 128, 128, 8
    $region5: #{tpu_custom_call.1} parent=1 // pred_fallthru
      _
    // Predicated region
    $region6: #{tpu_custom_call.1} parent=1 // pred_check
      _
    $region7: #{tpu_custom_call.1} parent=1 // pred_check_branch
      %27 = sbr.rel (0) target = $region9
    $region8: #{tpu_custom_call.1} parent=1 // pred_region
      %s29 = ssub.s32 2048, 2048
      %30 = vsyncadd [#allocation6], %s29
      %s31 = sshll.u32 [#allocation5], 4
      %s32 = int_to_ptr.vmem [resolvable:$true] %s31
      %37 = dma.hbm_to_vmem [thread:$0]  %s1, 2048, %s32, [#allocation6], 128, 128, 8
    $region9: #{tpu_custom_call.1} parent=1 // pred_fallthru
      _
    // Predicated region
    $region10: #{tpu_custom_call.1} parent=1 // pred_check
      _
    $region11: #{tpu_custom_call.1} parent=1 // pred_check_branch
      %39 = sbr.rel (0) target = $region13
    $region12: #{tpu_custom_call.1} parent=1 // pred_region
      _
    $region13: #{tpu_custom_call.1} parent=1 // pred_fallthru
      _
    // Predicated region
    $region14: #{tpu_custom_call.1} parent=1 // pred_check
      _
    $region15: #{tpu_custom_call.1} parent=1 // pred_check_branch
      %41 = sbr.rel (0) target = $region17
    $region16: #{tpu_custom_call.1} parent=1 // pred_region
      _
    $region17: #{tpu_custom_call.1} parent=1 // pred_fallthru
      _
    // Predicated region
    $region18: #{tpu_custom_call.1} parent=1 // pred_check
      _
    $region19: #{tpu_custom_call.1} parent=1 // pred_check_branch
      %43 = sbr.rel (0) target = $region21
    $region20: #{tpu_custom_call.1} parent=1 // pred_region
      _
    $region21: #{tpu_custom_call.1} parent=1 // pred_fallthru
      _
    // Predicated region
    $region22: #{tpu_custom_call.1} parent=1 // pred_check
      _
    $region23: #{tpu_custom_call.1} parent=1 // pred_check_branch
      %45 = sbr.rel (0) target = $region25
    $region24: #{tpu_custom_call.1} parent=1 // pred_region
      %46 = dma.done [#allocation4], 256
    $region25: #{tpu_custom_call.1} parent=1 // pred_fallthru
      _
    // Predicated region
    $region26: #{tpu_custom_call.1} parent=1 // pred_check
      _
    $region27: #{tpu_custom_call.1} parent=1 // pred_check_branch
      %48 = sbr.rel (0) target = $region29
    $region28: #{tpu_custom_call.1} parent=1 // pred_region
      %49 = dma.done [#allocation6], 2048
    $region29: #{tpu_custom_call.1} parent=1 // pred_fallthru
      _
    %v50 = vld [vmem:[#allocation3] sm:$0xff]
    %v51 = vld [vmem:[#allocation3 + $0x8] sm:$0xff]
    %v52 = vld [vmem:[#allocation5] sm:$0xff]
    %v53 = vld [vmem:[#allocation5 + $0x8] sm:$0xff]
    %v54 = vld [vmem:[#allocation5 + $0x10] sm:$0xff]
    %v55 = vld [vmem:[#allocation5 + $0x18] sm:$0xff]
    %v56 = vld [vmem:[#allocation5 + $0x20] sm:$0xff]
    %v57 = vld [vmem:[#allocation5 + $0x28] sm:$0xff]
    %v58 = vld [vmem:[#allocation5 + $0x30] sm:$0xff]
    %v59 = vld [vmem:[#allocation5 + $0x38] sm:$0xff]
    %v60 = vld [vmem:[%s2] sm:$0x1]
    %v62 = vlaneseq
    %v63 = vshrl.u32 %v62, 7
    %v64 = vsub.s32 0, %v63
    %v65 = vrot.slane %v60, %v64
    %vm67 = vcmask 261120
    %v69 = vsel %vm67, %v50, 0
    %v72 = vsel %vm67, %v51, 0
    %74 = vmatprep.subr.mxu0 0.0
    %75 = vmatpush1.msra.mxu0 0.0
    %76 = vmatprep.subr.mxu0 0.0
    %77 = vmatpush1.msra.mxu0 0.0
    %78 = vmatprep.subr.mxu0 0.0
    %79 = vmatpush1.msra.mxu0 0.0
    %80 = vmatprep.subr.mxu0 0.0
    %81 = vmatpush1.msra.mxu0 0.0
    %82 = vmatprep.subr.mxu0 0.0
    %83 = vmatpush1.msra.mxu0 0.0
    %84 = vmatprep.subr.mxu0 0.0
    %85 = vmatpush1.msra.mxu0 0.0
    %86 = vmatprep.subr.mxu0 0.0
    %87 = vmatpush1.msra.mxu0 0.0
    %88 = vmatprep.subr.mxu0 0.0
    %89 = vmatpush1.msra.mxu0 0.0
    %90 = vmatprep.subr.mxu0 0.0
    %91 = vmatpush1.msra.mxu0 0.0
    %92 = vmatprep.subr.mxu0 0.0
    %93 = vmatpush1.msra.mxu0 0.0
    %94 = vmatprep.subr.mxu0 0.0
    %95 = vmatpush1.msra.mxu0 0.0
    %96 = vmatprep.subr.mxu0 0.0
    %97 = vmatpush1.msra.mxu0 0.0
    %98 = vmatprep.subr.mxu0 0.0
    %99 = vmatpush1.msra.mxu0 %v55
    %100 = vmatprep.subr.mxu0 0.0
    %101 = vmatpush1.msra.mxu0 %v54
    %102 = vmatprep.subr.mxu0 0.0
    %103 = vmatpush1.msra.mxu0 %v53
    %104 = vmatprep.subr.mxu0 0.0
    %105 = vmatpush1.msra.mxu0 %v52
    %106 = vmatprep.subr.mxu0 0.0
    %107 = vmatpush2.msra.mxu0 0.0
    %108 = vmatprep.subr.mxu0 0.0
    %109 = vmatpush2.msra.mxu0 0.0
    %110 = vmatprep.subr.mxu0 0.0
    %111 = vmatpush2.msra.mxu0 0.0
    %112 = vmatprep.subr.mxu0 0.0
    %113 = vmatpush2.msra.mxu0 0.0
    %114 = vmatprep.subr.mxu0 0.0
    %115 = vmatpush2.msra.mxu0 0.0
    %116 = vmatprep.subr.mxu0 0.0
    %117 = vmatpush2.msra.mxu0 0.0
    %118 = vmatprep.subr.mxu0 0.0
    %119 = vmatpush2.msra.mxu0 0.0
    %120 = vmatprep.subr.mxu0 0.0
    %121 = vmatpush2.msra.mxu0 0.0
    %122 = vmatprep.subr.mxu0 0.0
    %123 = vmatpush2.msra.mxu0 0.0
    %124 = vmatprep.subr.mxu0 0.0
    %125 = vmatpush2.msra.mxu0 0.0
    %126 = vmatprep.subr.mxu0 0.0
    %127 = vmatpush2.msra.mxu0 0.0
    %128 = vmatprep.subr.mxu0 0.0
    %129 = vmatpush2.msra.mxu0 0.0
    %130 = vmatprep.subr.mxu0 0.0
    %131 = vmatpush2.msra.mxu0 0.0
    %132 = vmatprep.subr.mxu0 0.0
    %133 = vmatpush2.msra.mxu0 0.0
    %134 = vmatprep.subr.mxu0 0.0
    %135 = vmatpush2.msra.mxu0 0.0
    %136 = vmatprep.subr.mxu0 0.0
    %137 = vmatpush2.msra.mxu0 0.0
    %138 = vmatprep.mubr.f32.mxu0 0.0
    %139 = vmatmul.mubr.f32.gmra.mxu0 %v69
    %v140 = vpop.f32.mrf.mxu0
    %v141 = vadd.f32 %v65, %v140
    %v142 = vpop.f32.mrf.mxu0
    %143 = vmatprep.mubr.f32.mxu0 0.0
    %144 = vmatmul.mubr.f32.gmra.mxu0 %v72
    %v145 = vpop.f32.mrf.mxu0
    %v146 = vadd.f32 %v65, %v145
    %v147 = vpop.f32.mrf.mxu0
    %148 = vdwg.mxu0
    %v150 = vsel %vm67, 0.0, 0
    %152 = vmatprep.subr.mxu0 0.0
    %153 = vmatpush1.msra.mxu0 0.0
    %154 = vmatprep.subr.mxu0 0.0
    %155 = vmatpush1.msra.mxu0 0.0
    %156 = vmatprep.subr.mxu0 0.0
    %157 = vmatpush1.msra.mxu0 0.0
    %158 = vmatprep.subr.mxu0 0.0
    %159 = vmatpush1.msra.mxu0 0.0
    %160 = vmatprep.subr.mxu0 0.0
    %161 = vmatpush1.msra.mxu0 0.0
    %162 = vmatprep.subr.mxu0 0.0
    %163 = vmatpush1.msra.mxu0 0.0
    %164 = vmatprep.subr.mxu0 0.0
    %165 = vmatpush1.msra.mxu0 0.0
    %166 = vmatprep.subr.mxu0 0.0
    %167 = vmatpush1.msra.mxu0 0.0
    %168 = vmatprep.subr.mxu0 0.0
    %169 = vmatpush1.msra.mxu0 0.0
    %170 = vmatprep.subr.mxu0 0.0
    %171 = vmatpush1.msra.mxu0 0.0
    %172 = vmatprep.subr.mxu0 0.0
    %173 = vmatpush1.msra.mxu0 0.0
    %174 = vmatprep.subr.mxu0 0.0
    %175 = vmatpush1.msra.mxu0 0.0
    %176 = vmatprep.subr.mxu0 0.0
    %177 = vmatpush1.msra.mxu0 %v59
    %178 = vmatprep.subr.mxu0 0.0
    %179 = vmatpush1.msra.mxu0 %v58
    %180 = vmatprep.subr.mxu0 0.0
    %181 = vmatpush1.msra.mxu0 %v57
    %182 = vmatprep.subr.mxu0 0.0
    %183 = vmatpush1.msra.mxu0 %v56
    %184 = vmatprep.subr.mxu0 0.0
    %185 = vmatpush2.msra.mxu0 0.0
    %186 = vmatprep.subr.mxu0 0.0
    %187 = vmatpush2.msra.mxu0 0.0
    %188 = vmatprep.subr.mxu0 0.0
    %189 = vmatpush2.msra.mxu0 0.0
    %190 = vmatprep.subr.mxu0 0.0
    %191 = vmatpush2.msra.mxu0 0.0
    %192 = vmatprep.subr.mxu0 0.0
    %193 = vmatpush2.msra.mxu0 0.0
    %194 = vmatprep.subr.mxu0 0.0
    %195 = vmatpush2.msra.mxu0 0.0
    %196 = vmatprep.subr.mxu0 0.0
    %197 = vmatpush2.msra.mxu0 0.0
    %198 = vmatprep.subr.mxu0 0.0
    %199 = vmatpush2.msra.mxu0 0.0
    %200 = vmatprep.subr.mxu0 0.0
    %201 = vmatpush2.msra.mxu0 0.0
    %202 = vmatprep.subr.mxu0 0.0
    %203 = vmatpush2.msra.mxu0 0.0
    %204 = vmatprep.subr.mxu0 0.0
    %205 = vmatpush2.msra.mxu0 0.0
    %206 = vmatprep.subr.mxu0 0.0
    %207 = vmatpush2.msra.mxu0 0.0
    %208 = vmatprep.subr.mxu0 0.0
    %209 = vmatpush2.msra.mxu0 0.0
    %210 = vmatprep.subr.mxu0 0.0
    %211 = vmatpush2.msra.mxu0 0.0
    %212 = vmatprep.subr.mxu0 0.0
    %213 = vmatpush2.msra.mxu0 0.0
    %214 = vmatprep.subr.mxu0 0.0
    %215 = vmatpush2.msra.mxu0 0.0
    %216 = vmatprep.mubr.f32.mxu0 0.0
    %217 = vmatmul.mubr.f32.gmra.mxu0 %v150
    %v218 = vpop.f32.mrf.mxu0
    %v219 = vadd.f32 0.0, %v218
    %v220 = vpop.f32.mrf.mxu0
    %221 = vdwg.mxu0
    %v222 = vadd.f32 %v141, %v219
    %v223 = vxor.u32 %v222, 2147483648
    %v224 = vmul.f32 %v223, 1.442695
    %v225 = vpow.pop %v224
    %v226 = vadd.f32 %v225, 1.0
    %v227 = vrcp.pop %v226
    %v228 = vmul.f32 1.0, %v227
    %v229 = vtanh.pop %v222
    %v230 = vmul.f32 %v228, 0.0
    %232 = vrot.lane.b32.xlu0 %v229, 32
    %v233 = vpop.permute.xlu0 %232
    %v235 = vmul.f32 %v228, %v233
    %237 = vrot.lane.b32.xlu0 %v235, 32
    %v238 = vpop.permute.xlu0 %237
    %v240 = vadd.f32 %v230, %v238
    %v241 = vtanh.pop %v240
    %243 = vrot.lane.b32.xlu0 %v241, 32
    %v244 = vpop.permute.xlu0 %243
    %v246 = vmul.f32 %v228, %v244
    %248 = vrot.lane.b32.xlu0 %v246, 64
    %v249 = vpop.permute.xlu0 %248
    %v250 = vsel %vm67, %v249, 0
    %252 = vmatprep.subr.mxu0 0.0
    %253 = vmatpush1.msra.mxu0 0.0
    %254 = vmatprep.subr.mxu0 0.0
    %255 = vmatpush1.msra.mxu0 0.0
    %256 = vmatprep.subr.mxu0 0.0
    %257 = vmatpush1.msra.mxu0 0.0
    %258 = vmatprep.subr.mxu0 0.0
    %259 = vmatpush1.msra.mxu0 0.0
    %260 = vmatprep.subr.mxu0 0.0
    %261 = vmatpush1.msra.mxu0 0.0
    %262 = vmatprep.subr.mxu0 0.0
    %263 = vmatpush1.msra.mxu0 0.0
    %264 = vmatprep.subr.mxu0 0.0
    %265 = vmatpush1.msra.mxu0 0.0
    %266 = vmatprep.subr.mxu0 0.0
    %267 = vmatpush1.msra.mxu0 0.0
    %268 = vmatprep.subr.mxu0 0.0
    %269 = vmatpush1.msra.mxu0 0.0
    %270 = vmatprep.subr.mxu0 0.0
    %271 = vmatpush1.msra.mxu0 0.0
    %272 = vmatprep.subr.mxu0 0.0
    %273 = vmatpush1.msra.mxu0 0.0
    %274 = vmatprep.subr.mxu0 0.0
    %275 = vmatpush1.msra.mxu0 0.0
    %276 = vmatprep.subr.mxu0 0.0
    %277 = vmatpush1.msra.mxu0 %v59
    %278 = vmatprep.subr.mxu0 0.0
    %279 = vmatpush1.msra.mxu0 %v58
    %280 = vmatprep.subr.mxu0 0.0
    %281 = vmatpush1.msra.mxu0 %v57
    %282 = vmatprep.subr.mxu0 0.0
    %283 = vmatpush1.msra.mxu0 %v56
    %284 = vmatprep.subr.mxu0 0.0
    %285 = vmatpush2.msra.mxu0 0.0
    %286 = vmatprep.subr.mxu0 0.0
    %287 = vmatpush2.msra.mxu0 0.0
    %288 = vmatprep.subr.mxu0 0.0
    %289 = vmatpush2.msra.mxu0 0.0
    %290 = vmatprep.subr.mxu0 0.0
    %291 = vmatpush2.msra.mxu0 0.0
    %292 = vmatprep.subr.mxu0 0.0
    %293 = vmatpush2.msra.mxu0 0.0
    %294 = vmatprep.subr.mxu0 0.0
    %295 = vmatpush2.msra.mxu0 0.0
    %296 = vmatprep.subr.mxu0 0.0
    %297 = vmatpush2.msra.mxu0 0.0
    %298 = vmatprep.subr.mxu0 0.0
    %299 = vmatpush2.msra.mxu0 0.0
    %300 = vmatprep.subr.mxu0 0.0
    %301 = vmatpush2.msra.mxu0 0.0
    %302 = vmatprep.subr.mxu0 0.0
    %303 = vmatpush2.msra.mxu0 0.0
    %304 = vmatprep.subr.mxu0 0.0
    %305 = vmatpush2.msra.mxu0 0.0
    %306 = vmatprep.subr.mxu0 0.0
    %307 = vmatpush2.msra.mxu0 0.0
    %308 = vmatprep.subr.mxu0 0.0
    %309 = vmatpush2.msra.mxu0 0.0
    %310 = vmatprep.subr.mxu0 0.0
    %311 = vmatpush2.msra.mxu0 0.0
    %312 = vmatprep.subr.mxu0 0.0
    %313 = vmatpush2.msra.mxu0 0.0
    %314 = vmatprep.subr.mxu0 0.0
    %315 = vmatpush2.msra.mxu0 0.0
    %316 = vmatprep.mubr.f32.mxu0 0.0
    %317 = vmatmul.mubr.f32.gmra.mxu0 %v250
    %v318 = vpop.f32.mrf.mxu0
    %v319 = vadd.f32 0.0, %v318
    %v320 = vpop.f32.mrf.mxu0
    %321 = vdwg.mxu0
    %v323 = vrot.slane %v319, 6
    %v325 = vadd.f32 %v141, %v323
    %v326 = vxor.u32 %v325, 2147483648
    %v327 = vmul.f32 %v326, 1.442695
    %v328 = vpow.pop %v327
    %v329 = vadd.f32 %v328, 1.0
    %v330 = vrcp.pop %v329
    %v331 = vmul.f32 1.0, %v330
    %v332 = vtanh.pop %v325
    %v334 = vrot.slane %v240, 6
    %v336 = vmul.f32 %v331, %v334
    %338 = vrot.lane.b32.xlu0 %v332, 32
    %v339 = vpop.permute.xlu0 %338
    %v341 = vmul.f32 %v331, %v339
    %343 = vrot.lane.b32.xlu0 %v341, 32
    %v344 = vpop.permute.xlu0 %343
    %v346 = vadd.f32 %v336, %v344
    %v347 = vtanh.pop %v346
    %349 = vrot.lane.b32.xlu0 %v347, 32
    %v350 = vpop.permute.xlu0 %349
    %v352 = vmul.f32 %v331, %v350
    %v354 = vrot.slane %v352, 2
    %355 = vrot.lane.b32.xlu0 %v354, 64
    %v356 = vpop.permute.xlu0 %355
    %v357 = vsel %vm67, %v356, 0
    %359 = vmatprep.subr.mxu0 0.0
    %360 = vmatpush1.msra.mxu0 0.0
    %361 = vmatprep.subr.mxu0 0.0
    %362 = vmatpush1.msra.mxu0 0.0
    %363 = vmatprep.subr.mxu0 0.0
    %364 = vmatpush1.msra.mxu0 0.0
    %365 = vmatprep.subr.mxu0 0.0
    %366 = vmatpush1.msra.mxu0 0.0
    %367 = vmatprep.subr.mxu0 0.0
    %368 = vmatpush1.msra.mxu0 0.0
    %369 = vmatprep.subr.mxu0 0.0
    %370 = vmatpush1.msra.mxu0 0.0
    %371 = vmatprep.subr.mxu0 0.0
    %372 = vmatpush1.msra.mxu0 0.0
    %373 = vmatprep.subr.mxu0 0.0
    %374 = vmatpush1.msra.mxu0 0.0
    %375 = vmatprep.subr.mxu0 0.0
    %376 = vmatpush1.msra.mxu0 0.0
    %377 = vmatprep.subr.mxu0 0.0
    %378 = vmatpush1.msra.mxu0 0.0
    %379 = vmatprep.subr.mxu0 0.0
    %380 = vmatpush1.msra.mxu0 0.0
    %381 = vmatprep.subr.mxu0 0.0
    %382 = vmatpush1.msra.mxu0 0.0
    %383 = vmatprep.subr.mxu0 0.0
    %384 = vmatpush1.msra.mxu0 %v59
    %385 = vmatprep.subr.mxu0 0.0
    %386 = vmatpush1.msra.mxu0 %v58
    %387 = vmatprep.subr.mxu0 0.0
    %388 = vmatpush1.msra.mxu0 %v57
    %389 = vmatprep.subr.mxu0 0.0
    %390 = vmatpush1.msra.mxu0 %v56
    %391 = vmatprep.subr.mxu0 0.0
    %392 = vmatpush2.msra.mxu0 0.0
    %393 = vmatprep.subr.mxu0 0.0
    %394 = vmatpush2.msra.mxu0 0.0
    %395 = vmatprep.subr.mxu0 0.0
    %396 = vmatpush2.msra.mxu0 0.0
    %397 = vmatprep.subr.mxu0 0.0
    %398 = vmatpush2.msra.mxu0 0.0
    %399 = vmatprep.subr.mxu0 0.0
    %400 = vmatpush2.msra.mxu0 0.0
    %401 = vmatprep.subr.mxu0 0.0
    %402 = vmatpush2.msra.mxu0 0.0
    %403 = vmatprep.subr.mxu0 0.0
    %404 = vmatpush2.msra.mxu0 0.0
    %405 = vmatprep.subr.mxu0 0.0
    %406 = vmatpush2.msra.mxu0 0.0
    %407 = vmatprep.subr.mxu0 0.0
    %408 = vmatpush2.msra.mxu0 0.0
    %409 = vmatprep.subr.mxu0 0.0
    %410 = vmatpush2.msra.mxu0 0.0
    %411 = vmatprep.subr.mxu0 0.0
    %412 = vmatpush2.msra.mxu0 0.0
    %413 = vmatprep.subr.mxu0 0.0
    %414 = vmatpush2.msra.mxu0 0.0
    %415 = vmatprep.subr.mxu0 0.0
    %416 = vmatpush2.msra.mxu0 0.0
    %417 = vmatprep.subr.mxu0 0.0
    %418 = vmatpush2.msra.mxu0 0.0
    %419 = vmatprep.subr.mxu0 0.0
    %420 = vmatpush2.msra.mxu0 0.0
    %421 = vmatprep.subr.mxu0 0.0
    %422 = vmatpush2.msra.mxu0 0.0
    %423 = vmatprep.mubr.f32.mxu0 0.0
    %424 = vmatmul.mubr.f32.gmra.mxu0 %v357
    %v425 = vpop.f32.mrf.mxu0
    %v426 = vadd.f32 0.0, %v425
    %v427 = vpop.f32.mrf.mxu0
    %428 = vdwg.mxu0
    %v430 = vrot.slane %v426, 4
    %v432 = vadd.f32 %v141, %v430
    %v433 = vxor.u32 %v432, 2147483648
    %v434 = vmul.f32 %v433, 1.442695
    %v435 = vpow.pop %v434
    %v436 = vadd.f32 %v435, 1.0
    %v437 = vrcp.pop %v436
    %v438 = vmul.f32 1.0, %v437
    %v439 = vtanh.pop %v432
    %v441 = vrot.slane %v346, 6
    %v443 = vmul.f32 %v438, %v441
    %445 = vrot.lane.b32.xlu0 %v439, 32
    %v446 = vpop.permute.xlu0 %445
    %v448 = vmul.f32 %v438, %v446
    %450 = vrot.lane.b32.xlu0 %v448, 32
    %v451 = vpop.permute.xlu0 %450
    %v453 = vadd.f32 %v443, %v451
    %v454 = vtanh.pop %v453
    %456 = vrot.lane.b32.xlu0 %v454, 32
    %v457 = vpop.permute.xlu0 %456
    %v459 = vmul.f32 %v438, %v457
    %v461 = vrot.slane %v459, 4
    %462 = vrot.lane.b32.xlu0 %v461, 64
    %v463 = vpop.permute.xlu0 %462
    %v464 = vsel %vm67, %v463, 0
    %466 = vmatprep.subr.mxu0 0.0
    %467 = vmatpush1.msra.mxu0 0.0
    %468 = vmatprep.subr.mxu0 0.0
    %469 = vmatpush1.msra.mxu0 0.0
    %470 = vmatprep.subr.mxu0 0.0
    %471 = vmatpush1.msra.mxu0 0.0
    %472 = vmatprep.subr.mxu0 0.0
    %473 = vmatpush1.msra.mxu0 0.0
    %474 = vmatprep.subr.mxu0 0.0
    %475 = vmatpush1.msra.mxu0 0.0
    %476 = vmatprep.subr.mxu0 0.0
    %477 = vmatpush1.msra.mxu0 0.0
    %478 = vmatprep.subr.mxu0 0.0
    %479 = vmatpush1.msra.mxu0 0.0
    %480 = vmatprep.subr.mxu0 0.0
    %481 = vmatpush1.msra.mxu0 0.0
    %482 = vmatprep.subr.mxu0 0.0
    %483 = vmatpush1.msra.mxu0 0.0
    %484 = vmatprep.subr.mxu0 0.0
    %485 = vmatpush1.msra.mxu0 0.0
    %486 = vmatprep.subr.mxu0 0.0
    %487 = vmatpush1.msra.mxu0 0.0
    %488 = vmatprep.subr.mxu0 0.0
    %489 = vmatpush1.msra.mxu0 0.0
    %490 = vmatprep.subr.mxu0 0.0
    %491 = vmatpush1.msra.mxu0 %v59
    %492 = vmatprep.subr.mxu0 0.0
    %493 = vmatpush1.msra.mxu0 %v58
    %494 = vmatprep.subr.mxu0 0.0
    %495 = vmatpush1.msra.mxu0 %v57
    %496 = vmatprep.subr.mxu0 0.0
    %497 = vmatpush1.msra.mxu0 %v56
    %498 = vmatprep.subr.mxu0 0.0
    %499 = vmatpush2.msra.mxu0 0.0
    %500 = vmatprep.subr.mxu0 0.0
    %501 = vmatpush2.msra.mxu0 0.0
    %502 = vmatprep.subr.mxu0 0.0
    %503 = vmatpush2.msra.mxu0 0.0
    %504 = vmatprep.subr.mxu0 0.0
    %505 = vmatpush2.msra.mxu0 0.0
    %506 = vmatprep.subr.mxu0 0.0
    %507 = vmatpush2.msra.mxu0 0.0
    %508 = vmatprep.subr.mxu0 0.0
    %509 = vmatpush2.msra.mxu0 0.0
    %510 = vmatprep.subr.mxu0 0.0
    %511 = vmatpush2.msra.mxu0 0.0
    %512 = vmatprep.subr.mxu0 0.0
    %513 = vmatpush2.msra.mxu0 0.0
    %514 = vmatprep.subr.mxu0 0.0
    %515 = vmatpush2.msra.mxu0 0.0
    %516 = vmatprep.subr.mxu0 0.0
    %517 = vmatpush2.msra.mxu0 0.0
    %518 = vmatprep.subr.mxu0 0.0
    %519 = vmatpush2.msra.mxu0 0.0
    %520 = vmatprep.subr.mxu0 0.0
    %521 = vmatpush2.msra.mxu0 0.0
    %522 = vmatprep.subr.mxu0 0.0
    %523 = vmatpush2.msra.mxu0 0.0
    %524 = vmatprep.subr.mxu0 0.0
    %525 = vmatpush2.msra.mxu0 0.0
    %526 = vmatprep.subr.mxu0 0.0
    %527 = vmatpush2.msra.mxu0 0.0
    %528 = vmatprep.subr.mxu0 0.0
    %529 = vmatpush2.msra.mxu0 0.0
    %530 = vmatprep.mubr.f32.mxu0 0.0
    %531 = vmatmul.mubr.f32.gmra.mxu0 %v464
    %v532 = vpop.f32.mrf.mxu0
    %v533 = vadd.f32 0.0, %v532
    %v534 = vpop.f32.mrf.mxu0
    %535 = vdwg.mxu0
    %v537 = vrot.slane %v533, 2
    %v539 = vadd.f32 %v141, %v537
    %v540 = vxor.u32 %v539, 2147483648
    %v541 = vmul.f32 %v540, 1.442695
    %v542 = vpow.pop %v541
    %v543 = vadd.f32 %v542, 1.0
    %v544 = vrcp.pop %v543
    %v545 = vmul.f32 1.0, %v544
    %v546 = vtanh.pop %v539
    %v548 = vrot.slane %v453, 6
    %v550 = vmul.f32 %v545, %v548
    %552 = vrot.lane.b32.xlu0 %v546, 32
    %v553 = vpop.permute.xlu0 %552
    %v555 = vmul.f32 %v545, %v553
    %557 = vrot.lane.b32.xlu0 %v555, 32
    %v558 = vpop.permute.xlu0 %557
    %v560 = vadd.f32 %v550, %v558
    %v561 = vtanh.pop %v560
    %563 = vrot.lane.b32.xlu0 %v561, 32
    %v564 = vpop.permute.xlu0 %563
    %v566 = vmul.f32 %v545, %v564
    %v568 = vrot.slane %v566, 6
    %569 = vrot.lane.b32.xlu0 %v568, 64
    %v570 = vpop.permute.xlu0 %569
    %v571 = vsel %vm67, %v570, 0
    %573 = vmatprep.subr.mxu0 0.0
    %574 = vmatpush1.msra.mxu0 0.0
    %575 = vmatprep.subr.mxu0 0.0
    %576 = vmatpush1.msra.mxu0 0.0
    %577 = vmatprep.subr.mxu0 0.0
    %578 = vmatpush1.msra.mxu0 0.0
    %579 = vmatprep.subr.mxu0 0.0
    %580 = vmatpush1.msra.mxu0 0.0
    %581 = vmatprep.subr.mxu0 0.0
    %582 = vmatpush1.msra.mxu0 0.0
    %583 = vmatprep.subr.mxu0 0.0
    %584 = vmatpush1.msra.mxu0 0.0
    %585 = vmatprep.subr.mxu0 0.0
    %586 = vmatpush1.msra.mxu0 0.0
    %587 = vmatprep.subr.mxu0 0.0
    %588 = vmatpush1.msra.mxu0 0.0
    %589 = vmatprep.subr.mxu0 0.0
    %590 = vmatpush1.msra.mxu0 0.0
    %591 = vmatprep.subr.mxu0 0.0
    %592 = vmatpush1.msra.mxu0 0.0
    %593 = vmatprep.subr.mxu0 0.0
    %594 = vmatpush1.msra.mxu0 0.0
    %595 = vmatprep.subr.mxu0 0.0
    %596 = vmatpush1.msra.mxu0 0.0
    %597 = vmatprep.subr.mxu0 0.0
    %598 = vmatpush1.msra.mxu0 %v59
    %599 = vmatprep.subr.mxu0 0.0
    %600 = vmatpush1.msra.mxu0 %v58
    %601 = vmatprep.subr.mxu0 0.0
    %602 = vmatpush1.msra.mxu0 %v57
    %603 = vmatprep.subr.mxu0 0.0
    %604 = vmatpush1.msra.mxu0 %v56
    %605 = vmatprep.subr.mxu0 0.0
    %606 = vmatpush2.msra.mxu0 0.0
    %607 = vmatprep.subr.mxu0 0.0
    %608 = vmatpush2.msra.mxu0 0.0
    %609 = vmatprep.subr.mxu0 0.0
    %610 = vmatpush2.msra.mxu0 0.0
    %611 = vmatprep.subr.mxu0 0.0
    %612 = vmatpush2.msra.mxu0 0.0
    %613 = vmatprep.subr.mxu0 0.0
    %614 = vmatpush2.msra.mxu0 0.0
    %615 = vmatprep.subr.mxu0 0.0
    %616 = vmatpush2.msra.mxu0 0.0
    %617 = vmatprep.subr.mxu0 0.0
    %618 = vmatpush2.msra.mxu0 0.0
    %619 = vmatprep.subr.mxu0 0.0
    %620 = vmatpush2.msra.mxu0 0.0
    %621 = vmatprep.subr.mxu0 0.0
    %622 = vmatpush2.msra.mxu0 0.0
    %623 = vmatprep.subr.mxu0 0.0
    %624 = vmatpush2.msra.mxu0 0.0
    %625 = vmatprep.subr.mxu0 0.0
    %626 = vmatpush2.msra.mxu0 0.0
    %627 = vmatprep.subr.mxu0 0.0
    %628 = vmatpush2.msra.mxu0 0.0
    %629 = vmatprep.subr.mxu0 0.0
    %630 = vmatpush2.msra.mxu0 0.0
    %631 = vmatprep.subr.mxu0 0.0
    %632 = vmatpush2.msra.mxu0 0.0
    %633 = vmatprep.subr.mxu0 0.0
    %634 = vmatpush2.msra.mxu0 0.0
    %635 = vmatprep.subr.mxu0 0.0
    %636 = vmatpush2.msra.mxu0 0.0
    %637 = vmatprep.mubr.f32.mxu0 0.0
    %638 = vmatmul.mubr.f32.gmra.mxu0 %v571
    %v639 = vpop.f32.mrf.mxu0
    %v640 = vadd.f32 0.0, %v639
    %v641 = vpop.f32.mrf.mxu0
    %642 = vdwg.mxu0
    %v643 = vadd.f32 %v146, %v640
    %v644 = vxor.u32 %v643, 2147483648
    %v645 = vmul.f32 %v644, 1.442695
    %v646 = vpow.pop %v645
    %v647 = vadd.f32 %v646, 1.0
    %v648 = vrcp.pop %v647
    %v649 = vmul.f32 1.0, %v648
    %v650 = vtanh.pop %v643
    %v652 = vrot.slane %v560, 6
    %v654 = vmul.f32 %v649, %v652
    %656 = vrot.lane.b32.xlu0 %v650, 32
    %v657 = vpop.permute.xlu0 %656
    %v659 = vmul.f32 %v649, %v657
    %661 = vrot.lane.b32.xlu0 %v659, 32
    %v662 = vpop.permute.xlu0 %661
    %v664 = vadd.f32 %v654, %v662
    %v665 = vtanh.pop %v664
    %667 = vrot.lane.b32.xlu0 %v665, 32
    %v668 = vpop.permute.xlu0 %667
    %v670 = vmul.f32 %v649, %v668
    %672 = vrot.lane.b32.xlu0 %v670, 64
    %v673 = vpop.permute.xlu0 %672
    %v674 = vsel %vm67, %v673, 0
    %676 = vmatprep.subr.mxu0 0.0
    %677 = vmatpush1.msra.mxu0 0.0
    %678 = vmatprep.subr.mxu0 0.0
    %679 = vmatpush1.msra.mxu0 0.0
    %680 = vmatprep.subr.mxu0 0.0
    %681 = vmatpush1.msra.mxu0 0.0
    %682 = vmatprep.subr.mxu0 0.0
    %683 = vmatpush1.msra.mxu0 0.0
    %684 = vmatprep.subr.mxu0 0.0
    %685 = vmatpush1.msra.mxu0 0.0
    %686 = vmatprep.subr.mxu0 0.0
    %687 = vmatpush1.msra.mxu0 0.0
    %688 = vmatprep.subr.mxu0 0.0
    %689 = vmatpush1.msra.mxu0 0.0
    %690 = vmatprep.subr.mxu0 0.0
    %691 = vmatpush1.msra.mxu0 0.0
    %692 = vmatprep.subr.mxu0 0.0
    %693 = vmatpush1.msra.mxu0 0.0
    %694 = vmatprep.subr.mxu0 0.0
    %695 = vmatpush1.msra.mxu0 0.0
    %696 = vmatprep.subr.mxu0 0.0
    %697 = vmatpush1.msra.mxu0 0.0
    %698 = vmatprep.subr.mxu0 0.0
    %699 = vmatpush1.msra.mxu0 0.0
    %700 = vmatprep.subr.mxu0 0.0
    %701 = vmatpush1.msra.mxu0 %v59
    %702 = vmatprep.subr.mxu0 0.0
    %703 = vmatpush1.msra.mxu0 %v58
    %704 = vmatprep.subr.mxu0 0.0
    %705 = vmatpush1.msra.mxu0 %v57
    %706 = vmatprep.subr.mxu0 0.0
    %707 = vmatpush1.msra.mxu0 %v56
    %708 = vmatprep.subr.mxu0 0.0
    %709 = vmatpush2.msra.mxu0 0.0
    %710 = vmatprep.subr.mxu0 0.0
    %711 = vmatpush2.msra.mxu0 0.0
    %712 = vmatprep.subr.mxu0 0.0
    %713 = vmatpush2.msra.mxu0 0.0
    %714 = vmatprep.subr.mxu0 0.0
    %715 = vmatpush2.msra.mxu0 0.0
    %716 = vmatprep.subr.mxu0 0.0
    %717 = vmatpush2.msra.mxu0 0.0
    %718 = vmatprep.subr.mxu0 0.0
    %719 = vmatpush2.msra.mxu0 0.0
    %720 = vmatprep.subr.mxu0 0.0
    %721 = vmatpush2.msra.mxu0 0.0
    %722 = vmatprep.subr.mxu0 0.0
    %723 = vmatpush2.msra.mxu0 0.0
    %724 = vmatprep.subr.mxu0 0.0
    %725 = vmatpush2.msra.mxu0 0.0
    %726 = vmatprep.subr.mxu0 0.0
    %727 = vmatpush2.msra.mxu0 0.0
    %728 = vmatprep.subr.mxu0 0.0
    %729 = vmatpush2.msra.mxu0 0.0
    %730 = vmatprep.subr.mxu0 0.0
    %731 = vmatpush2.msra.mxu0 0.0
    %732 = vmatprep.subr.mxu0 0.0
    %733 = vmatpush2.msra.mxu0 0.0
    %734 = vmatprep.subr.mxu0 0.0
    %735 = vmatpush2.msra.mxu0 0.0
    %736 = vmatprep.subr.mxu0 0.0
    %737 = vmatpush2.msra.mxu0 0.0
    %738 = vmatprep.subr.mxu0 0.0
    %739 = vmatpush2.msra.mxu0 0.0
    %740 = vmatprep.mubr.f32.mxu0 0.0
    %741 = vmatmul.mubr.f32.gmra.mxu0 %v674
    %v742 = vpop.f32.mrf.mxu0
    %v743 = vadd.f32 0.0, %v742
    %v744 = vpop.f32.mrf.mxu0
    %745 = vdwg.mxu0
    %v747 = vrot.slane %v743, 6
    %v749 = vadd.f32 %v146, %v747
    %v750 = vxor.u32 %v749, 2147483648
    %v751 = vmul.f32 %v750, 1.442695
    %v752 = vpow.pop %v751
    %v753 = vadd.f32 %v752, 1.0
    %v754 = vrcp.pop %v753
    %v755 = vmul.f32 1.0, %v754
    %v756 = vtanh.pop %v749
    %v758 = vrot.slane %v664, 6
    %v760 = vmul.f32 %v755, %v758
    %762 = vrot.lane.b32.xlu0 %v756, 32
    %v763 = vpop.permute.xlu0 %762
    %v765 = vmul.f32 %v755, %v763
    %767 = vrot.lane.b32.xlu0 %v765, 32
    %v768 = vpop.permute.xlu0 %767
    %v770 = vadd.f32 %v760, %v768
    %v771 = vtanh.pop %v770
    %773 = vrot.lane.b32.xlu0 %v771, 32
    %v774 = vpop.permute.xlu0 %773
    %v776 = vmul.f32 %v755, %v774
    %v778 = vrot.slane %v776, 2
    %779 = vrot.lane.b32.xlu0 %v778, 64
    %v780 = vpop.permute.xlu0 %779
    %v781 = vsel %vm67, %v780, 0
    %783 = vmatprep.subr.mxu0 0.0
    %784 = vmatpush1.msra.mxu0 0.0
    %785 = vmatprep.subr.mxu0 0.0
    %786 = vmatpush1.msra.mxu0 0.0
    %787 = vmatprep.subr.mxu0 0.0
    %788 = vmatpush1.msra.mxu0 0.0
    %789 = vmatprep.subr.mxu0 0.0
    %790 = vmatpush1.msra.mxu0 0.0
    %791 = vmatprep.subr.mxu0 0.0
    %792 = vmatpush1.msra.mxu0 0.0
    %793 = vmatprep.subr.mxu0 0.0
    %794 = vmatpush1.msra.mxu0 0.0
    %795 = vmatprep.subr.mxu0 0.0
    %796 = vmatpush1.msra.mxu0 0.0
    %797 = vmatprep.subr.mxu0 0.0
    %798 = vmatpush1.msra.mxu0 0.0
    %799 = vmatprep.subr.mxu0 0.0
    %800 = vmatpush1.msra.mxu0 0.0
    %801 = vmatprep.subr.mxu0 0.0
    %802 = vmatpush1.msra.mxu0 0.0
    %803 = vmatprep.subr.mxu0 0.0
    %804 = vmatpush1.msra.mxu0 0.0
    %805 = vmatprep.subr.mxu0 0.0
    %806 = vmatpush1.msra.mxu0 0.0
    %807 = vmatprep.subr.mxu0 0.0
    %808 = vmatpush1.msra.mxu0 %v59
    %809 = vmatprep.subr.mxu0 0.0
    %810 = vmatpush1.msra.mxu0 %v58
    %811 = vmatprep.subr.mxu0 0.0
    %812 = vmatpush1.msra.mxu0 %v57
    %813 = vmatprep.subr.mxu0 0.0
    %814 = vmatpush1.msra.mxu0 %v56
    %815 = vmatprep.subr.mxu0 0.0
    %816 = vmatpush2.msra.mxu0 0.0
    %817 = vmatprep.subr.mxu0 0.0
    %818 = vmatpush2.msra.mxu0 0.0
    %819 = vmatprep.subr.mxu0 0.0
    %820 = vmatpush2.msra.mxu0 0.0
    %821 = vmatprep.subr.mxu0 0.0
    %822 = vmatpush2.msra.mxu0 0.0
    %823 = vmatprep.subr.mxu0 0.0
    %824 = vmatpush2.msra.mxu0 0.0
    %825 = vmatprep.subr.mxu0 0.0
    %826 = vmatpush2.msra.mxu0 0.0
    %827 = vmatprep.subr.mxu0 0.0
    %828 = vmatpush2.msra.mxu0 0.0
    %829 = vmatprep.subr.mxu0 0.0
    %830 = vmatpush2.msra.mxu0 0.0
    %831 = vmatprep.subr.mxu0 0.0
    %832 = vmatpush2.msra.mxu0 0.0
    %833 = vmatprep.subr.mxu0 0.0
    %834 = vmatpush2.msra.mxu0 0.0
    %835 = vmatprep.subr.mxu0 0.0
    %836 = vmatpush2.msra.mxu0 0.0
    %837 = vmatprep.subr.mxu0 0.0
    %838 = vmatpush2.msra.mxu0 0.0
    %839 = vmatprep.subr.mxu0 0.0
    %840 = vmatpush2.msra.mxu0 0.0
    %841 = vmatprep.subr.mxu0 0.0
    %842 = vmatpush2.msra.mxu0 0.0
    %843 = vmatprep.subr.mxu0 0.0
    %844 = vmatpush2.msra.mxu0 0.0
    %845 = vmatprep.subr.mxu0 0.0
    %846 = vmatpush2.msra.mxu0 0.0
    %847 = vmatprep.mubr.f32.mxu0 0.0
    %848 = vmatmul.mubr.f32.gmra.mxu0 %v781
    %v849 = vpop.f32.mrf.mxu0
    %v850 = vadd.f32 0.0, %v849
    %v851 = vpop.f32.mrf.mxu0
    %852 = vdwg.mxu0
    %v854 = vrot.slane %v850, 4
    %v856 = vadd.f32 %v146, %v854
    %v857 = vxor.u32 %v856, 2147483648
    %v858 = vmul.f32 %v857, 1.442695
    %v859 = vpow.pop %v858
    %v860 = vadd.f32 %v859, 1.0
    %v861 = vrcp.pop %v860
    %v862 = vmul.f32 1.0, %v861
    %v863 = vtanh.pop %v856
    %v865 = vrot.slane %v770, 6
    %v867 = vmul.f32 %v862, %v865
    %869 = vrot.lane.b32.xlu0 %v863, 32
    %v870 = vpop.permute.xlu0 %869
    %v872 = vmul.f32 %v862, %v870
    %874 = vrot.lane.b32.xlu0 %v872, 32
    %v875 = vpop.permute.xlu0 %874
    %v877 = vadd.f32 %v867, %v875
    %v878 = vtanh.pop %v877
    %880 = vrot.lane.b32.xlu0 %v878, 32
    %v881 = vpop.permute.xlu0 %880
    %v883 = vmul.f32 %v862, %v881
    %v885 = vrot.slane %v883, 4
    %886 = vrot.lane.b32.xlu0 %v885, 64
    %v887 = vpop.permute.xlu0 %886
    %v888 = vsel %vm67, %v887, 0
    %890 = vmatprep.subr.mxu0 0.0
    %891 = vmatpush1.msra.mxu0 0.0
    %892 = vmatprep.subr.mxu0 0.0
    %893 = vmatpush1.msra.mxu0 0.0
    %894 = vmatprep.subr.mxu0 0.0
    %895 = vmatpush1.msra.mxu0 0.0
    %896 = vmatprep.subr.mxu0 0.0
    %897 = vmatpush1.msra.mxu0 0.0
    %898 = vmatprep.subr.mxu0 0.0
    %899 = vmatpush1.msra.mxu0 0.0
    %900 = vmatprep.subr.mxu0 0.0
    %901 = vmatpush1.msra.mxu0 0.0
    %902 = vmatprep.subr.mxu0 0.0
    %903 = vmatpush1.msra.mxu0 0.0
    %904 = vmatprep.subr.mxu0 0.0
    %905 = vmatpush1.msra.mxu0 0.0
    %906 = vmatprep.subr.mxu0 0.0
    %907 = vmatpush1.msra.mxu0 0.0
    %908 = vmatprep.subr.mxu0 0.0
    %909 = vmatpush1.msra.mxu0 0.0
    %910 = vmatprep.subr.mxu0 0.0
    %911 = vmatpush1.msra.mxu0 0.0
    %912 = vmatprep.subr.mxu0 0.0
    %913 = vmatpush1.msra.mxu0 0.0
    %914 = vmatprep.subr.mxu0 0.0
    %915 = vmatpush1.msra.mxu0 %v59
    %916 = vmatprep.subr.mxu0 0.0
    %917 = vmatpush1.msra.mxu0 %v58
    %918 = vmatprep.subr.mxu0 0.0
    %919 = vmatpush1.msra.mxu0 %v57
    %920 = vmatprep.subr.mxu0 0.0
    %921 = vmatpush1.msra.mxu0 %v56
    %922 = vmatprep.subr.mxu0 0.0
    %923 = vmatpush2.msra.mxu0 0.0
    %924 = vmatprep.subr.mxu0 0.0
    %925 = vmatpush2.msra.mxu0 0.0
    %926 = vmatprep.subr.mxu0 0.0
    %927 = vmatpush2.msra.mxu0 0.0
    %928 = vmatprep.subr.mxu0 0.0
    %929 = vmatpush2.msra.mxu0 0.0
    %930 = vmatprep.subr.mxu0 0.0
    %931 = vmatpush2.msra.mxu0 0.0
    %932 = vmatprep.subr.mxu0 0.0
    %933 = vmatpush2.msra.mxu0 0.0
    %934 = vmatprep.subr.mxu0 0.0
    %935 = vmatpush2.msra.mxu0 0.0
    %936 = vmatprep.subr.mxu0 0.0
    %937 = vmatpush2.msra.mxu0 0.0
    %938 = vmatprep.subr.mxu0 0.0
    %939 = vmatpush2.msra.mxu0 0.0
    %940 = vmatprep.subr.mxu0 0.0
    %941 = vmatpush2.msra.mxu0 0.0
    %942 = vmatprep.subr.mxu0 0.0
    %943 = vmatpush2.msra.mxu0 0.0
    %944 = vmatprep.subr.mxu0 0.0
    %945 = vmatpush2.msra.mxu0 0.0
    %946 = vmatprep.subr.mxu0 0.0
    %947 = vmatpush2.msra.mxu0 0.0
    %948 = vmatprep.subr.mxu0 0.0
    %949 = vmatpush2.msra.mxu0 0.0
    %950 = vmatprep.subr.mxu0 0.0
    %951 = vmatpush2.msra.mxu0 0.0
    %952 = vmatprep.subr.mxu0 0.0
    %953 = vmatpush2.msra.mxu0 0.0
    %954 = vmatprep.mubr.f32.mxu0 0.0
    %955 = vmatmul.mubr.f32.gmra.mxu0 %v888
    %v956 = vpop.f32.mrf.mxu0
    %v957 = vadd.f32 0.0, %v956
    %v958 = vpop.f32.mrf.mxu0
    %959 = vdwg.mxu0
    %v961 = vrot.slane %v957, 2
    %v963 = vadd.f32 %v146, %v961
    %v964 = vxor.u32 %v963, 2147483648
    %v965 = vmul.f32 %v964, 1.442695
    %v966 = vpow.pop %v965
    %v967 = vadd.f32 %v966, 1.0
    %v968 = vrcp.pop %v967
    %v969 = vmul.f32 1.0, %v968
    %v970 = vtanh.pop %v963
    %v972 = vrot.slane %v877, 6
    %v974 = vmul.f32 %v969, %v972
    %976 = vrot.lane.b32.xlu0 %v970, 32
    %v977 = vpop.permute.xlu0 %976
    %v979 = vmul.f32 %v969, %v977
    %981 = vrot.lane.b32.xlu0 %v979, 32
    %v982 = vpop.permute.xlu0 %981
    %v984 = vadd.f32 %v974, %v982
    %v985 = vtanh.pop %v984
    %987 = vrot.lane.b32.xlu0 %v985, 32
    %v988 = vpop.permute.xlu0 %987
    %v990 = vmul.f32 %v969, %v988
    %vm991 = vcmask 1041408
    %v992 = vsel %vm991, %v246, %v352
    %vm993 = vcmask 1043456
    %v994 = vsel %vm993, %v992, %v459
    %vm995 = vcmask 1045504
    %v996 = vsel %vm995, %v994, %v566
    %v997 = vsel %vm991, %v670, %v776
    %v998 = vsel %vm993, %v997, %v883
    %v999 = vsel %vm995, %v998, %v990
    %s1000 = scalar_lea.vmem [#allocation5], 64
    %v1001 = vld [vmem:[%s1000] sm:$0xff]
    %v1002 = vld [vmem:[%s1000 + $0x8] sm:$0xff]
    %v1003 = vld [vmem:[%s1000 + $0x10] sm:$0xff]
    %v1004 = vld [vmem:[%s1000 + $0x18] sm:$0xff]
    %v1005 = vld [vmem:[%s1000 + $0x20] sm:$0xff]
    %v1006 = vld [vmem:[%s1000 + $0x28] sm:$0xff]
    %v1007 = vld [vmem:[%s1000 + $0x30] sm:$0xff]
    %v1008 = vld [vmem:[%s1000 + $0x38] sm:$0xff]
    %s1009 = scalar_lea.vmem %s2, 1
    %v1010 = vld [vmem:[%s1009] sm:$0x1]
    %v1012 = vlaneseq
    %v1013 = vshrl.u32 %v1012, 7
    %v1014 = vsub.s32 0, %v1013
    %v1015 = vrot.slane %v1010, %v1014
    %1019 = vrot.lane.b32.xlu0 %v996, 64
    %v1020 = vpop.permute.xlu0 %1019
    %1021 = vrot.lane.b32.xlu0 %v999, 64
    %v1022 = vpop.permute.xlu0 %1021
    %v1023 = vsel %vm67, %v1020, 0
    %v1025 = vsel %vm67, %v1022, 0
    %1027 = vmatprep.subr.mxu0 0.0
    %1028 = vmatpush1.msra.mxu0 0.0
    %1029 = vmatprep.subr.mxu0 0.0
    %1030 = vmatpush1.msra.mxu0 0.0
    %1031 = vmatprep.subr.mxu0 0.0
    %1032 = vmatpush1.msra.mxu0 0.0
    %1033 = vmatprep.subr.mxu0 0.0
    %1034 = vmatpush1.msra.mxu0 0.0
    %1035 = vmatprep.subr.mxu0 0.0
    %1036 = vmatpush1.msra.mxu0 0.0
    %1037 = vmatprep.subr.mxu0 0.0
    %1038 = vmatpush1.msra.mxu0 0.0
    %1039 = vmatprep.subr.mxu0 0.0
    %1040 = vmatpush1.msra.mxu0 0.0
    %1041 = vmatprep.subr.mxu0 0.0
    %1042 = vmatpush1.msra.mxu0 0.0
    %1043 = vmatprep.subr.mxu0 0.0
    %1044 = vmatpush1.msra.mxu0 0.0
    %1045 = vmatprep.subr.mxu0 0.0
    %1046 = vmatpush1.msra.mxu0 0.0
    %1047 = vmatprep.subr.mxu0 0.0
    %1048 = vmatpush1.msra.mxu0 0.0
    %1049 = vmatprep.subr.mxu0 0.0
    %1050 = vmatpush1.msra.mxu0 0.0
    %1051 = vmatprep.subr.mxu0 0.0
    %1052 = vmatpush1.msra.mxu0 %v1004
    %1053 = vmatprep.subr.mxu0 0.0
    %1054 = vmatpush1.msra.mxu0 %v1003
    %1055 = vmatprep.subr.mxu0 0.0
    %1056 = vmatpush1.msra.mxu0 %v1002
    %1057 = vmatprep.subr.mxu0 0.0
    %1058 = vmatpush1.msra.mxu0 %v1001
    %1059 = vmatprep.subr.mxu0 0.0
    %1060 = vmatpush2.msra.mxu0 0.0
    %1061 = vmatprep.subr.mxu0 0.0
    %1062 = vmatpush2.msra.mxu0 0.0
    %1063 = vmatprep.subr.mxu0 0.0
    %1064 = vmatpush2.msra.mxu0 0.0
    %1065 = vmatprep.subr.mxu0 0.0
    %1066 = vmatpush2.msra.mxu0 0.0
    %1067 = vmatprep.subr.mxu0 0.0
    %1068 = vmatpush2.msra.mxu0 0.0
    %1069 = vmatprep.subr.mxu0 0.0
    %1070 = vmatpush2.msra.mxu0 0.0
    %1071 = vmatprep.subr.mxu0 0.0
    %1072 = vmatpush2.msra.mxu0 0.0
    %1073 = vmatprep.subr.mxu0 0.0
    %1074 = vmatpush2.msra.mxu0 0.0
    %1075 = vmatprep.subr.mxu0 0.0
    %1076 = vmatpush2.msra.mxu0 0.0
    %1077 = vmatprep.subr.mxu0 0.0
    %1078 = vmatpush2.msra.mxu0 0.0
    %1079 = vmatprep.subr.mxu0 0.0
    %1080 = vmatpush2.msra.mxu0 0.0
    %1081 = vmatprep.subr.mxu0 0.0
    %1082 = vmatpush2.msra.mxu0 0.0
    %1083 = vmatprep.subr.mxu0 0.0
    %1084 = vmatpush2.msra.mxu0 0.0
    %1085 = vmatprep.subr.mxu0 0.0
    %1086 = vmatpush2.msra.mxu0 0.0
    %1087 = vmatprep.subr.mxu0 0.0
    %1088 = vmatpush2.msra.mxu0 0.0
    %1089 = vmatprep.subr.mxu0 0.0
    %1090 = vmatpush2.msra.mxu0 0.0
    %1091 = vmatprep.mubr.f32.mxu0 0.0
    %1092 = vmatmul.mubr.f32.gmra.mxu0 %v1023
    %v1093 = vpop.f32.mrf.mxu0
    %v1094 = vadd.f32 %v1015, %v1093
    %v1095 = vpop.f32.mrf.mxu0
    %1096 = vmatprep.mubr.f32.mxu0 0.0
    %1097 = vmatmul.mubr.f32.gmra.mxu0 %v1025
    %v1098 = vpop.f32.mrf.mxu0
    %v1099 = vadd.f32 %v1015, %v1098
    %v1100 = vpop.f32.mrf.mxu0
    %1101 = vdwg.mxu0
    %1102 = vmatprep.subr.mxu0 0.0
    %1103 = vmatpush1.msra.mxu0 0.0
    %1104 = vmatprep.subr.mxu0 0.0
    %1105 = vmatpush1.msra.mxu0 0.0
    %1106 = vmatprep.subr.mxu0 0.0
    %1107 = vmatpush1.msra.mxu0 0.0
    %1108 = vmatprep.subr.mxu0 0.0
    %1109 = vmatpush1.msra.mxu0 0.0
    %1110 = vmatprep.subr.mxu0 0.0
    %1111 = vmatpush1.msra.mxu0 0.0
    %1112 = vmatprep.subr.mxu0 0.0
    %1113 = vmatpush1.msra.mxu0 0.0
    %1114 = vmatprep.subr.mxu0 0.0
    %1115 = vmatpush1.msra.mxu0 0.0
    %1116 = vmatprep.subr.mxu0 0.0
    %1117 = vmatpush1.msra.mxu0 0.0
    %1118 = vmatprep.subr.mxu0 0.0
    %1119 = vmatpush1.msra.mxu0 0.0
    %1120 = vmatprep.subr.mxu0 0.0
    %1121 = vmatpush1.msra.mxu0 0.0
    %1122 = vmatprep.subr.mxu0 0.0
    %1123 = vmatpush1.msra.mxu0 0.0
    %1124 = vmatprep.subr.mxu0 0.0
    %1125 = vmatpush1.msra.mxu0 0.0
    %1126 = vmatprep.subr.mxu0 0.0
    %1127 = vmatpush1.msra.mxu0 %v1008
    %1128 = vmatprep.subr.mxu0 0.0
    %1129 = vmatpush1.msra.mxu0 %v1007
    %1130 = vmatprep.subr.mxu0 0.0
    %1131 = vmatpush1.msra.mxu0 %v1006
    %1132 = vmatprep.subr.mxu0 0.0
    %1133 = vmatpush1.msra.mxu0 %v1005
    %1134 = vmatprep.subr.mxu0 0.0
    %1135 = vmatpush2.msra.mxu0 0.0
    %1136 = vmatprep.subr.mxu0 0.0
    %1137 = vmatpush2.msra.mxu0 0.0
    %1138 = vmatprep.subr.mxu0 0.0
    %1139 = vmatpush2.msra.mxu0 0.0
    %1140 = vmatprep.subr.mxu0 0.0
    %1141 = vmatpush2.msra.mxu0 0.0
    %1142 = vmatprep.subr.mxu0 0.0
    %1143 = vmatpush2.msra.mxu0 0.0
    %1144 = vmatprep.subr.mxu0 0.0
    %1145 = vmatpush2.msra.mxu0 0.0
    %1146 = vmatprep.subr.mxu0 0.0
    %1147 = vmatpush2.msra.mxu0 0.0
    %1148 = vmatprep.subr.mxu0 0.0
    %1149 = vmatpush2.msra.mxu0 0.0
    %1150 = vmatprep.subr.mxu0 0.0
    %1151 = vmatpush2.msra.mxu0 0.0
    %1152 = vmatprep.subr.mxu0 0.0
    %1153 = vmatpush2.msra.mxu0 0.0
    %1154 = vmatprep.subr.mxu0 0.0
    %1155 = vmatpush2.msra.mxu0 0.0
    %1156 = vmatprep.subr.mxu0 0.0
    %1157 = vmatpush2.msra.mxu0 0.0
    %1158 = vmatprep.subr.mxu0 0.0
    %1159 = vmatpush2.msra.mxu0 0.0
    %1160 = vmatprep.subr.mxu0 0.0
    %1161 = vmatpush2.msra.mxu0 0.0
    %1162 = vmatprep.subr.mxu0 0.0
    %1163 = vmatpush2.msra.mxu0 0.0
    %1164 = vmatprep.subr.mxu0 0.0
    %1165 = vmatpush2.msra.mxu0 0.0
    %1166 = vmatprep.mubr.f32.mxu0 0.0
    %1167 = vmatmul.mubr.f32.gmra.mxu0 %v150
    %v1168 = vpop.f32.mrf.mxu0
    %v1169 = vadd.f32 0.0, %v1168
    %v1170 = vpop.f32.mrf.mxu0
    %1171 = vdwg.mxu0
    %v1172 = vadd.f32 %v1094, %v1169
    %v1173 = vxor.u32 %v1172, 2147483648
    %v1174 = vmul.f32 %v1173, 1.442695
    %v1175 = vpow.pop %v1174
    %v1176 = vadd.f32 %v1175, 1.0
    %v1177 = vrcp.pop %v1176
    %v1178 = vmul.f32 1.0, %v1177
    %v1179 = vtanh.pop %v1172
    %v1180 = vmul.f32 %v1178, 0.0
    %1182 = vrot.lane.b32.xlu0 %v1179, 32
    %v1183 = vpop.permute.xlu0 %1182
    %v1185 = vmul.f32 %v1178, %v1183
    %1187 = vrot.lane.b32.xlu0 %v1185, 32
    %v1188 = vpop.permute.xlu0 %1187
    %v1190 = vadd.f32 %v1180, %v1188
    %v1191 = vtanh.pop %v1190
    %1193 = vrot.lane.b32.xlu0 %v1191, 32
    %v1194 = vpop.permute.xlu0 %1193
    %v1196 = vmul.f32 %v1178, %v1194
    %1198 = vrot.lane.b32.xlu0 %v1196, 64
    %v1199 = vpop.permute.xlu0 %1198
    %v1200 = vsel %vm67, %v1199, 0
    %1202 = vmatprep.subr.mxu0 0.0
    %1203 = vmatpush1.msra.mxu0 0.0
    %1204 = vmatprep.subr.mxu0 0.0
    %1205 = vmatpush1.msra.mxu0 0.0
    %1206 = vmatprep.subr.mxu0 0.0
    %1207 = vmatpush1.msra.mxu0 0.0
    %1208 = vmatprep.subr.mxu0 0.0
    %1209 = vmatpush1.msra.mxu0 0.0
    %1210 = vmatprep.subr.mxu0 0.0
    %1211 = vmatpush1.msra.mxu0 0.0
    %1212 = vmatprep.subr.mxu0 0.0
    %1213 = vmatpush1.msra.mxu0 0.0
    %1214 = vmatprep.subr.mxu0 0.0
    %1215 = vmatpush1.msra.mxu0 0.0
    %1216 = vmatprep.subr.mxu0 0.0
    %1217 = vmatpush1.msra.mxu0 0.0
    %1218 = vmatprep.subr.mxu0 0.0
    %1219 = vmatpush1.msra.mxu0 0.0
    %1220 = vmatprep.subr.mxu0 0.0
    %1221 = vmatpush1.msra.mxu0 0.0
    %1222 = vmatprep.subr.mxu0 0.0
    %1223 = vmatpush1.msra.mxu0 0.0
    %1224 = vmatprep.subr.mxu0 0.0
    %1225 = vmatpush1.msra.mxu0 0.0
    %1226 = vmatprep.subr.mxu0 0.0
    %1227 = vmatpush1.msra.mxu0 %v1008
    %1228 = vmatprep.subr.mxu0 0.0
    %1229 = vmatpush1.msra.mxu0 %v1007
    %1230 = vmatprep.subr.mxu0 0.0
    %1231 = vmatpush1.msra.mxu0 %v1006
    %1232 = vmatprep.subr.mxu0 0.0
    %1233 = vmatpush1.msra.mxu0 %v1005
    %1234 = vmatprep.subr.mxu0 0.0
    %1235 = vmatpush2.msra.mxu0 0.0
    %1236 = vmatprep.subr.mxu0 0.0
    %1237 = vmatpush2.msra.mxu0 0.0
    %1238 = vmatprep.subr.mxu0 0.0
    %1239 = vmatpush2.msra.mxu0 0.0
    %1240 = vmatprep.subr.mxu0 0.0
    %1241 = vmatpush2.msra.mxu0 0.0
    %1242 = vmatprep.subr.mxu0 0.0
    %1243 = vmatpush2.msra.mxu0 0.0
    %1244 = vmatprep.subr.mxu0 0.0
    %1245 = vmatpush2.msra.mxu0 0.0
    %1246 = vmatprep.subr.mxu0 0.0
    %1247 = vmatpush2.msra.mxu0 0.0
    %1248 = vmatprep.subr.mxu0 0.0
    %1249 = vmatpush2.msra.mxu0 0.0
    %1250 = vmatprep.subr.mxu0 0.0
    %1251 = vmatpush2.msra.mxu0 0.0
    %1252 = vmatprep.subr.mxu0 0.0
    %1253 = vmatpush2.msra.mxu0 0.0
    %1254 = vmatprep.subr.mxu0 0.0
    %1255 = vmatpush2.msra.mxu0 0.0
    %1256 = vmatprep.subr.mxu0 0.0
    %1257 = vmatpush2.msra.mxu0 0.0
    %1258 = vmatprep.subr.mxu0 0.0
    %1259 = vmatpush2.msra.mxu0 0.0
    %1260 = vmatprep.subr.mxu0 0.0
    %1261 = vmatpush2.msra.mxu0 0.0
    %1262 = vmatprep.subr.mxu0 0.0
    %1263 = vmatpush2.msra.mxu0 0.0
    %1264 = vmatprep.subr.mxu0 0.0
    %1265 = vmatpush2.msra.mxu0 0.0
    %1266 = vmatprep.mubr.f32.mxu0 0.0
    %1267 = vmatmul.mubr.f32.gmra.mxu0 %v1200
    %v1268 = vpop.f32.mrf.mxu0
    %v1269 = vadd.f32 0.0, %v1268
    %v1270 = vpop.f32.mrf.mxu0
    %1271 = vdwg.mxu0
    %v1273 = vrot.slane %v1269, 6
    %v1275 = vadd.f32 %v1094, %v1273
    %v1276 = vxor.u32 %v1275, 2147483648
    %v1277 = vmul.f32 %v1276, 1.442695
    %v1278 = vpow.pop %v1277
    %v1279 = vadd.f32 %v1278, 1.0
    %v1280 = vrcp.pop %v1279
    %v1281 = vmul.f32 1.0, %v1280
    %v1282 = vtanh.pop %v1275
    %v1284 = vrot.slane %v1190, 6
    %v1286 = vmul.f32 %v1281, %v1284
    %1288 = vrot.lane.b32.xlu0 %v1282, 32
    %v1289 = vpop.permute.xlu0 %1288
    %v1291 = vmul.f32 %v1281, %v1289
    %1293 = vrot.lane.b32.xlu0 %v1291, 32
    %v1294 = vpop.permute.xlu0 %1293
    %v1296 = vadd.f32 %v1286, %v1294
    %v1297 = vtanh.pop %v1296
    %1299 = vrot.lane.b32.xlu0 %v1297, 32
    %v1300 = vpop.permute.xlu0 %1299
    %v1302 = vmul.f32 %v1281, %v1300
    %v1304 = vrot.slane %v1302, 2
    %1305 = vrot.lane.b32.xlu0 %v1304, 64
    %v1306 = vpop.permute.xlu0 %1305
    %v1307 = vsel %vm67, %v1306, 0
    %1309 = vmatprep.subr.mxu0 0.0
    %1310 = vmatpush1.msra.mxu0 0.0
    %1311 = vmatprep.subr.mxu0 0.0
    %1312 = vmatpush1.msra.mxu0 0.0
    %1313 = vmatprep.subr.mxu0 0.0
    %1314 = vmatpush1.msra.mxu0 0.0
    %1315 = vmatprep.subr.mxu0 0.0
    %1316 = vmatpush1.msra.mxu0 0.0
    %1317 = vmatprep.subr.mxu0 0.0
    %1318 = vmatpush1.msra.mxu0 0.0
    %1319 = vmatprep.subr.mxu0 0.0
    %1320 = vmatpush1.msra.mxu0 0.0
    %1321 = vmatprep.subr.mxu0 0.0
    %1322 = vmatpush1.msra.mxu0 0.0
    %1323 = vmatprep.subr.mxu0 0.0
    %1324 = vmatpush1.msra.mxu0 0.0
    %1325 = vmatprep.subr.mxu0 0.0
    %1326 = vmatpush1.msra.mxu0 0.0
    %1327 = vmatprep.subr.mxu0 0.0
    %1328 = vmatpush1.msra.mxu0 0.0
    %1329 = vmatprep.subr.mxu0 0.0
    %1330 = vmatpush1.msra.mxu0 0.0
    %1331 = vmatprep.subr.mxu0 0.0
    %1332 = vmatpush1.msra.mxu0 0.0
    %1333 = vmatprep.subr.mxu0 0.0
    %1334 = vmatpush1.msra.mxu0 %v1008
    %1335 = vmatprep.subr.mxu0 0.0
    %1336 = vmatpush1.msra.mxu0 %v1007
    %1337 = vmatprep.subr.mxu0 0.0
    %1338 = vmatpush1.msra.mxu0 %v1006
    %1339 = vmatprep.subr.mxu0 0.0
    %1340 = vmatpush1.msra.mxu0 %v1005
    %1341 = vmatprep.subr.mxu0 0.0
    %1342 = vmatpush2.msra.mxu0 0.0
    %1343 = vmatprep.subr.mxu0 0.0
    %1344 = vmatpush2.msra.mxu0 0.0
    %1345 = vmatprep.subr.mxu0 0.0
    %1346 = vmatpush2.msra.mxu0 0.0
    %1347 = vmatprep.subr.mxu0 0.0
    %1348 = vmatpush2.msra.mxu0 0.0
    %1349 = vmatprep.subr.mxu0 0.0
    %1350 = vmatpush2.msra.mxu0 0.0
    %1351 = vmatprep.subr.mxu0 0.0
    %1352 = vmatpush2.msra.mxu0 0.0
    %1353 = vmatprep.subr.mxu0 0.0
    %1354 = vmatpush2.msra.mxu0 0.0
    %1355 = vmatprep.subr.mxu0 0.0
    %1356 = vmatpush2.msra.mxu0 0.0
    %1357 = vmatprep.subr.mxu0 0.0
    %1358 = vmatpush2.msra.mxu0 0.0
    %1359 = vmatprep.subr.mxu0 0.0
    %1360 = vmatpush2.msra.mxu0 0.0
    %1361 = vmatprep.subr.mxu0 0.0
    %1362 = vmatpush2.msra.mxu0 0.0
    %1363 = vmatprep.subr.mxu0 0.0
    %1364 = vmatpush2.msra.mxu0 0.0
    %1365 = vmatprep.subr.mxu0 0.0
    %1366 = vmatpush2.msra.mxu0 0.0
    %1367 = vmatprep.subr.mxu0 0.0
    %1368 = vmatpush2.msra.mxu0 0.0
    %1369 = vmatprep.subr.mxu0 0.0
    %1370 = vmatpush2.msra.mxu0 0.0
    %1371 = vmatprep.subr.mxu0 0.0
    %1372 = vmatpush2.msra.mxu0 0.0
    %1373 = vmatprep.mubr.f32.mxu0 0.0
    %1374 = vmatmul.mubr.f32.gmra.mxu0 %v1307
    %v1375 = vpop.f32.mrf.mxu0
    %v1376 = vadd.f32 0.0, %v1375
    %v1377 = vpop.f32.mrf.mxu0
    %1378 = vdwg.mxu0
    %v1380 = vrot.slane %v1376, 4
    %v1382 = vadd.f32 %v1094, %v1380
    %v1383 = vxor.u32 %v1382, 2147483648
    %v1384 = vmul.f32 %v1383, 1.442695
    %v1385 = vpow.pop %v1384
    %v1386 = vadd.f32 %v1385, 1.0
    %v1387 = vrcp.pop %v1386
    %v1388 = vmul.f32 1.0, %v1387
    %v1389 = vtanh.pop %v1382
    %v1391 = vrot.slane %v1296, 6
    %v1393 = vmul.f32 %v1388, %v1391
    %1395 = vrot.lane.b32.xlu0 %v1389, 32
    %v1396 = vpop.permute.xlu0 %1395
    %v1398 = vmul.f32 %v1388, %v1396
    %1400 = vrot.lane.b32.xlu0 %v1398, 32
    %v1401 = vpop.permute.xlu0 %1400
    %v1403 = vadd.f32 %v1393, %v1401
    %v1404 = vtanh.pop %v1403
    %1406 = vrot.lane.b32.xlu0 %v1404, 32
    %v1407 = vpop.permute.xlu0 %1406
    %v1409 = vmul.f32 %v1388, %v1407
    %v1411 = vrot.slane %v1409, 4
    %1412 = vrot.lane.b32.xlu0 %v1411, 64
    %v1413 = vpop.permute.xlu0 %1412
    %v1414 = vsel %vm67, %v1413, 0
    %1416 = vmatprep.subr.mxu0 0.0
    %1417 = vmatpush1.msra.mxu0 0.0
    %1418 = vmatprep.subr.mxu0 0.0
    %1419 = vmatpush1.msra.mxu0 0.0
    %1420 = vmatprep.subr.mxu0 0.0
    %1421 = vmatpush1.msra.mxu0 0.0
    %1422 = vmatprep.subr.mxu0 0.0
    %1423 = vmatpush1.msra.mxu0 0.0
    %1424 = vmatprep.subr.mxu0 0.0
    %1425 = vmatpush1.msra.mxu0 0.0
    %1426 = vmatprep.subr.mxu0 0.0
    %1427 = vmatpush1.msra.mxu0 0.0
    %1428 = vmatprep.subr.mxu0 0.0
    %1429 = vmatpush1.msra.mxu0 0.0
    %1430 = vmatprep.subr.mxu0 0.0
    %1431 = vmatpush1.msra.mxu0 0.0
    %1432 = vmatprep.subr.mxu0 0.0
    %1433 = vmatpush1.msra.mxu0 0.0
    %1434 = vmatprep.subr.mxu0 0.0
    %1435 = vmatpush1.msra.mxu0 0.0
    %1436 = vmatprep.subr.mxu0 0.0
    %1437 = vmatpush1.msra.mxu0 0.0
    %1438 = vmatprep.subr.mxu0 0.0
    %1439 = vmatpush1.msra.mxu0 0.0
    %1440 = vmatprep.subr.mxu0 0.0
    %1441 = vmatpush1.msra.mxu0 %v1008
    %1442 = vmatprep.subr.mxu0 0.0
    %1443 = vmatpush1.msra.mxu0 %v1007
    %1444 = vmatprep.subr.mxu0 0.0
    %1445 = vmatpush1.msra.mxu0 %v1006
    %1446 = vmatprep.subr.mxu0 0.0
    %1447 = vmatpush1.msra.mxu0 %v1005
    %1448 = vmatprep.subr.mxu0 0.0
    %1449 = vmatpush2.msra.mxu0 0.0
    %1450 = vmatprep.subr.mxu0 0.0
    %1451 = vmatpush2.msra.mxu0 0.0
    %1452 = vmatprep.subr.mxu0 0.0
    %1453 = vmatpush2.msra.mxu0 0.0
    %1454 = vmatprep.subr.mxu0 0.0
    %1455 = vmatpush2.msra.mxu0 0.0
    %1456 = vmatprep.subr.mxu0 0.0
    %1457 = vmatpush2.msra.mxu0 0.0
    %1458 = vmatprep.subr.mxu0 0.0
    %1459 = vmatpush2.msra.mxu0 0.0
    %1460 = vmatprep.subr.mxu0 0.0
    %1461 = vmatpush2.msra.mxu0 0.0
    %1462 = vmatprep.subr.mxu0 0.0
    %1463 = vmatpush2.msra.mxu0 0.0
    %1464 = vmatprep.subr.mxu0 0.0
    %1465 = vmatpush2.msra.mxu0 0.0
    %1466 = vmatprep.subr.mxu0 0.0
    %1467 = vmatpush2.msra.mxu0 0.0
    %1468 = vmatprep.subr.mxu0 0.0
    %1469 = vmatpush2.msra.mxu0 0.0
    %1470 = vmatprep.subr.mxu0 0.0
    %1471 = vmatpush2.msra.mxu0 0.0
    %1472 = vmatprep.subr.mxu0 0.0
    %1473 = vmatpush2.msra.mxu0 0.0
    %1474 = vmatprep.subr.mxu0 0.0
    %1475 = vmatpush2.msra.mxu0 0.0
    %1476 = vmatprep.subr.mxu0 0.0
    %1477 = vmatpush2.msra.mxu0 0.0
    %1478 = vmatprep.subr.mxu0 0.0
    %1479 = vmatpush2.msra.mxu0 0.0
    %1480 = vmatprep.mubr.f32.mxu0 0.0
    %1481 = vmatmul.mubr.f32.gmra.mxu0 %v1414
    %v1482 = vpop.f32.mrf.mxu0
    %v1483 = vadd.f32 0.0, %v1482
    %v1484 = vpop.f32.mrf.mxu0
    %1485 = vdwg.mxu0
    %v1487 = vrot.slane %v1483, 2
    %v1489 = vadd.f32 %v1094, %v1487
    %v1490 = vxor.u32 %v1489, 2147483648
    %v1491 = vmul.f32 %v1490, 1.442695
    %v1492 = vpow.pop %v1491
    %v1493 = vadd.f32 %v1492, 1.0
    %v1494 = vrcp.pop %v1493
    %v1495 = vmul.f32 1.0, %v1494
    %v1496 = vtanh.pop %v1489
    %v1498 = vrot.slane %v1403, 6
    %v1500 = vmul.f32 %v1495, %v1498
    %1502 = vrot.lane.b32.xlu0 %v1496, 32
    %v1503 = vpop.permute.xlu0 %1502
    %v1505 = vmul.f32 %v1495, %v1503
    %1507 = vrot.lane.b32.xlu0 %v1505, 32
    %v1508 = vpop.permute.xlu0 %1507
    %v1510 = vadd.f32 %v1500, %v1508
    %v1511 = vtanh.pop %v1510
    %1513 = vrot.lane.b32.xlu0 %v1511, 32
    %v1514 = vpop.permute.xlu0 %1513
    %v1516 = vmul.f32 %v1495, %v1514
    %v1518 = vrot.slane %v1516, 6
    %1519 = vrot.lane.b32.xlu0 %v1518, 64
    %v1520 = vpop.permute.xlu0 %1519
    %v1521 = vsel %vm67, %v1520, 0
    %1523 = vmatprep.subr.mxu0 0.0
    %1524 = vmatpush1.msra.mxu0 0.0
    %1525 = vmatprep.subr.mxu0 0.0
    %1526 = vmatpush1.msra.mxu0 0.0
    %1527 = vmatprep.subr.mxu0 0.0
    %1528 = vmatpush1.msra.mxu0 0.0
    %1529 = vmatprep.subr.mxu0 0.0
    %1530 = vmatpush1.msra.mxu0 0.0
    %1531 = vmatprep.subr.mxu0 0.0
    %1532 = vmatpush1.msra.mxu0 0.0
    %1533 = vmatprep.subr.mxu0 0.0
    %1534 = vmatpush1.msra.mxu0 0.0
    %1535 = vmatprep.subr.mxu0 0.0
    %1536 = vmatpush1.msra.mxu0 0.0
    %1537 = vmatprep.subr.mxu0 0.0
    %1538 = vmatpush1.msra.mxu0 0.0
    %1539 = vmatprep.subr.mxu0 0.0
    %1540 = vmatpush1.msra.mxu0 0.0
    %1541 = vmatprep.subr.mxu0 0.0
    %1542 = vmatpush1.msra.mxu0 0.0
    %1543 = vmatprep.subr.mxu0 0.0
    %1544 = vmatpush1.msra.mxu0 0.0
    %1545 = vmatprep.subr.mxu0 0.0
    %1546 = vmatpush1.msra.mxu0 0.0
    %1547 = vmatprep.subr.mxu0 0.0
    %1548 = vmatpush1.msra.mxu0 %v1008
    %1549 = vmatprep.subr.mxu0 0.0
    %1550 = vmatpush1.msra.mxu0 %v1007
    %1551 = vmatprep.subr.mxu0 0.0
    %1552 = vmatpush1.msra.mxu0 %v1006
    %1553 = vmatprep.subr.mxu0 0.0
    %1554 = vmatpush1.msra.mxu0 %v1005
    %1555 = vmatprep.subr.mxu0 0.0
    %1556 = vmatpush2.msra.mxu0 0.0
    %1557 = vmatprep.subr.mxu0 0.0
    %1558 = vmatpush2.msra.mxu0 0.0
    %1559 = vmatprep.subr.mxu0 0.0
    %1560 = vmatpush2.msra.mxu0 0.0
    %1561 = vmatprep.subr.mxu0 0.0
    %1562 = vmatpush2.msra.mxu0 0.0
    %1563 = vmatprep.subr.mxu0 0.0
    %1564 = vmatpush2.msra.mxu0 0.0
    %1565 = vmatprep.subr.mxu0 0.0
    %1566 = vmatpush2.msra.mxu0 0.0
    %1567 = vmatprep.subr.mxu0 0.0
    %1568 = vmatpush2.msra.mxu0 0.0
    %1569 = vmatprep.subr.mxu0 0.0
    %1570 = vmatpush2.msra.mxu0 0.0
    %1571 = vmatprep.subr.mxu0 0.0
    %1572 = vmatpush2.msra.mxu0 0.0
    %1573 = vmatprep.subr.mxu0 0.0
    %1574 = vmatpush2.msra.mxu0 0.0
    %1575 = vmatprep.subr.mxu0 0.0
    %1576 = vmatpush2.msra.mxu0 0.0
    %1577 = vmatprep.subr.mxu0 0.0
    %1578 = vmatpush2.msra.mxu0 0.0
    %1579 = vmatprep.subr.mxu0 0.0
    %1580 = vmatpush2.msra.mxu0 0.0
    %1581 = vmatprep.subr.mxu0 0.0
    %1582 = vmatpush2.msra.mxu0 0.0
    %1583 = vmatprep.subr.mxu0 0.0
    %1584 = vmatpush2.msra.mxu0 0.0
    %1585 = vmatprep.subr.mxu0 0.0
    %1586 = vmatpush2.msra.mxu0 0.0
    %1587 = vmatprep.mubr.f32.mxu0 0.0
    %1588 = vmatmul.mubr.f32.gmra.mxu0 %v1521
    %v1589 = vpop.f32.mrf.mxu0
    %v1590 = vadd.f32 0.0, %v1589
    %v1591 = vpop.f32.mrf.mxu0
    %1592 = vdwg.mxu0
    %v1593 = vadd.f32 %v1099, %v1590
    %v1594 = vxor.u32 %v1593, 2147483648
    %v1595 = vmul.f32 %v1594, 1.442695
    %v1596 = vpow.pop %v1595
    %v1597 = vadd.f32 %v1596, 1.0
    %v1598 = vrcp.pop %v1597
    %v1599 = vmul.f32 1.0, %v1598
    %v1600 = vtanh.pop %v1593
    %v1602 = vrot.slane %v1510, 6
    %v1604 = vmul.f32 %v1599, %v1602
    %1606 = vrot.lane.b32.xlu0 %v1600, 32
    %v1607 = vpop.permute.xlu0 %1606
    %v1609 = vmul.f32 %v1599, %v1607
    %1611 = vrot.lane.b32.xlu0 %v1609, 32
    %v1612 = vpop.permute.xlu0 %1611
    %v1614 = vadd.f32 %v1604, %v1612
    %v1615 = vtanh.pop %v1614
    %1617 = vrot.lane.b32.xlu0 %v1615, 32
    %v1618 = vpop.permute.xlu0 %1617
    %v1620 = vmul.f32 %v1599, %v1618
    %1622 = vrot.lane.b32.xlu0 %v1620, 64
    %v1623 = vpop.permute.xlu0 %1622
    %v1624 = vsel %vm67, %v1623, 0
    %1626 = vmatprep.subr.mxu0 0.0
    %1627 = vmatpush1.msra.mxu0 0.0
    %1628 = vmatprep.subr.mxu0 0.0
    %1629 = vmatpush1.msra.mxu0 0.0
    %1630 = vmatprep.subr.mxu0 0.0
    %1631 = vmatpush1.msra.mxu0 0.0
    %1632 = vmatprep.subr.mxu0 0.0
    %1633 = vmatpush1.msra.mxu0 0.0
    %1634 = vmatprep.subr.mxu0 0.0
    %1635 = vmatpush1.msra.mxu0 0.0
    %1636 = vmatprep.subr.mxu0 0.0
    %1637 = vmatpush1.msra.mxu0 0.0
    %1638 = vmatprep.subr.mxu0 0.0
    %1639 = vmatpush1.msra.mxu0 0.0
    %1640 = vmatprep.subr.mxu0 0.0
    %1641 = vmatpush1.msra.mxu0 0.0
    %1642 = vmatprep.subr.mxu0 0.0
    %1643 = vmatpush1.msra.mxu0 0.0
    %1644 = vmatprep.subr.mxu0 0.0
    %1645 = vmatpush1.msra.mxu0 0.0
    %1646 = vmatprep.subr.mxu0 0.0
    %1647 = vmatpush1.msra.mxu0 0.0
    %1648 = vmatprep.subr.mxu0 0.0
    %1649 = vmatpush1.msra.mxu0 0.0
    %1650 = vmatprep.subr.mxu0 0.0
    %1651 = vmatpush1.msra.mxu0 %v1008
    %1652 = vmatprep.subr.mxu0 0.0
    %1653 = vmatpush1.msra.mxu0 %v1007
    %1654 = vmatprep.subr.mxu0 0.0
    %1655 = vmatpush1.msra.mxu0 %v1006
    %1656 = vmatprep.subr.mxu0 0.0
    %1657 = vmatpush1.msra.mxu0 %v1005
    %1658 = vmatprep.subr.mxu0 0.0
    %1659 = vmatpush2.msra.mxu0 0.0
    %1660 = vmatprep.subr.mxu0 0.0
    %1661 = vmatpush2.msra.mxu0 0.0
    %1662 = vmatprep.subr.mxu0 0.0
    %1663 = vmatpush2.msra.mxu0 0.0
    %1664 = vmatprep.subr.mxu0 0.0
    %1665 = vmatpush2.msra.mxu0 0.0
    %1666 = vmatprep.subr.mxu0 0.0
    %1667 = vmatpush2.msra.mxu0 0.0
    %1668 = vmatprep.subr.mxu0 0.0
    %1669 = vmatpush2.msra.mxu0 0.0
    %1670 = vmatprep.subr.mxu0 0.0
    %1671 = vmatpush2.msra.mxu0 0.0
    %1672 = vmatprep.subr.mxu0 0.0
    %1673 = vmatpush2.msra.mxu0 0.0
    %1674 = vmatprep.subr.mxu0 0.0
    %1675 = vmatpush2.msra.mxu0 0.0
    %1676 = vmatprep.subr.mxu0 0.0
    %1677 = vmatpush2.msra.mxu0 0.0
    %1678 = vmatprep.subr.mxu0 0.0
    %1679 = vmatpush2.msra.mxu0 0.0
    %1680 = vmatprep.subr.mxu0 0.0
    %1681 = vmatpush2.msra.mxu0 0.0
    %1682 = vmatprep.subr.mxu0 0.0
    %1683 = vmatpush2.msra.mxu0 0.0
    %1684 = vmatprep.subr.mxu0 0.0
    %1685 = vmatpush2.msra.mxu0 0.0
    %1686 = vmatprep.subr.mxu0 0.0
    %1687 = vmatpush2.msra.mxu0 0.0
    %1688 = vmatprep.subr.mxu0 0.0
    %1689 = vmatpush2.msra.mxu0 0.0
    %1690 = vmatprep.mubr.f32.mxu0 0.0
    %1691 = vmatmul.mubr.f32.gmra.mxu0 %v1624
    %v1692 = vpop.f32.mrf.mxu0
    %v1693 = vadd.f32 0.0, %v1692
    %v1694 = vpop.f32.mrf.mxu0
    %1695 = vdwg.mxu0
    %v1697 = vrot.slane %v1693, 6
    %v1699 = vadd.f32 %v1099, %v1697
    %v1700 = vxor.u32 %v1699, 2147483648
    %v1701 = vmul.f32 %v1700, 1.442695
    %v1702 = vpow.pop %v1701
    %v1703 = vadd.f32 %v1702, 1.0
    %v1704 = vrcp.pop %v1703
    %v1705 = vmul.f32 1.0, %v1704
    %v1706 = vtanh.pop %v1699
    %v1708 = vrot.slane %v1614, 6
    %v1710 = vmul.f32 %v1705, %v1708
    %1712 = vrot.lane.b32.xlu0 %v1706, 32
    %v1713 = vpop.permute.xlu0 %1712
    %v1715 = vmul.f32 %v1705, %v1713
    %1717 = vrot.lane.b32.xlu0 %v1715, 32
    %v1718 = vpop.permute.xlu0 %1717
    %v1720 = vadd.f32 %v1710, %v1718
    %v1721 = vtanh.pop %v1720
    %1723 = vrot.lane.b32.xlu0 %v1721, 32
    %v1724 = vpop.permute.xlu0 %1723
    %v1726 = vmul.f32 %v1705, %v1724
    %v1728 = vrot.slane %v1726, 2
    %1729 = vrot.lane.b32.xlu0 %v1728, 64
    %v1730 = vpop.permute.xlu0 %1729
    %v1731 = vsel %vm67, %v1730, 0
    %1733 = vmatprep.subr.mxu0 0.0
    %1734 = vmatpush1.msra.mxu0 0.0
    %1735 = vmatprep.subr.mxu0 0.0
    %1736 = vmatpush1.msra.mxu0 0.0
    %1737 = vmatprep.subr.mxu0 0.0
    %1738 = vmatpush1.msra.mxu0 0.0
    %1739 = vmatprep.subr.mxu0 0.0
    %1740 = vmatpush1.msra.mxu0 0.0
    %1741 = vmatprep.subr.mxu0 0.0
    %1742 = vmatpush1.msra.mxu0 0.0
    %1743 = vmatprep.subr.mxu0 0.0
    %1744 = vmatpush1.msra.mxu0 0.0
    %1745 = vmatprep.subr.mxu0 0.0
    %1746 = vmatpush1.msra.mxu0 0.0
    %1747 = vmatprep.subr.mxu0 0.0
    %1748 = vmatpush1.msra.mxu0 0.0
    %1749 = vmatprep.subr.mxu0 0.0
    %1750 = vmatpush1.msra.mxu0 0.0
    %1751 = vmatprep.subr.mxu0 0.0
    %1752 = vmatpush1.msra.mxu0 0.0
    %1753 = vmatprep.subr.mxu0 0.0
    %1754 = vmatpush1.msra.mxu0 0.0
    %1755 = vmatprep.subr.mxu0 0.0
    %1756 = vmatpush1.msra.mxu0 0.0
    %1757 = vmatprep.subr.mxu0 0.0
    %1758 = vmatpush1.msra.mxu0 %v1008
    %1759 = vmatprep.subr.mxu0 0.0
    %1760 = vmatpush1.msra.mxu0 %v1007
    %1761 = vmatprep.subr.mxu0 0.0
    %1762 = vmatpush1.msra.mxu0 %v1006
    %1763 = vmatprep.subr.mxu0 0.0
    %1764 = vmatpush1.msra.mxu0 %v1005
    %1765 = vmatprep.subr.mxu0 0.0
    %1766 = vmatpush2.msra.mxu0 0.0
    %1767 = vmatprep.subr.mxu0 0.0
    %1768 = vmatpush2.msra.mxu0 0.0
    %1769 = vmatprep.subr.mxu0 0.0
    %1770 = vmatpush2.msra.mxu0 0.0
    %1771 = vmatprep.subr.mxu0 0.0
    %1772 = vmatpush2.msra.mxu0 0.0
    %1773 = vmatprep.subr.mxu0 0.0
    %1774 = vmatpush2.msra.mxu0 0.0
    %1775 = vmatprep.subr.mxu0 0.0
    %1776 = vmatpush2.msra.mxu0 0.0
    %1777 = vmatprep.subr.mxu0 0.0
    %1778 = vmatpush2.msra.mxu0 0.0
    %1779 = vmatprep.subr.mxu0 0.0
    %1780 = vmatpush2.msra.mxu0 0.0
    %1781 = vmatprep.subr.mxu0 0.0
    %1782 = vmatpush2.msra.mxu0 0.0
    %1783 = vmatprep.subr.mxu0 0.0
    %1784 = vmatpush2.msra.mxu0 0.0
    %1785 = vmatprep.subr.mxu0 0.0
    %1786 = vmatpush2.msra.mxu0 0.0
    %1787 = vmatprep.subr.mxu0 0.0
    %1788 = vmatpush2.msra.mxu0 0.0
    %1789 = vmatprep.subr.mxu0 0.0
    %1790 = vmatpush2.msra.mxu0 0.0
    %1791 = vmatprep.subr.mxu0 0.0
    %1792 = vmatpush2.msra.mxu0 0.0
    %1793 = vmatprep.subr.mxu0 0.0
    %1794 = vmatpush2.msra.mxu0 0.0
    %1795 = vmatprep.subr.mxu0 0.0
    %1796 = vmatpush2.msra.mxu0 0.0
    %1797 = vmatprep.mubr.f32.mxu0 0.0
    %1798 = vmatmul.mubr.f32.gmra.mxu0 %v1731
    %v1799 = vpop.f32.mrf.mxu0
    %v1800 = vadd.f32 0.0, %v1799
    %v1801 = vpop.f32.mrf.mxu0
    %1802 = vdwg.mxu0
    %v1804 = vrot.slane %v1800, 4
    %v1806 = vadd.f32 %v1099, %v1804
    %v1807 = vxor.u32 %v1806, 2147483648
    %v1808 = vmul.f32 %v1807, 1.442695
    %v1809 = vpow.pop %v1808
    %v1810 = vadd.f32 %v1809, 1.0
    %v1811 = vrcp.pop %v1810
    %v1812 = vmul.f32 1.0, %v1811
    %v1813 = vtanh.pop %v1806
    %v1815 = vrot.slane %v1720, 6
    %v1817 = vmul.f32 %v1812, %v1815
    %1819 = vrot.lane.b32.xlu0 %v1813, 32
    %v1820 = vpop.permute.xlu0 %1819
    %v1822 = vmul.f32 %v1812, %v1820
    %1824 = vrot.lane.b32.xlu0 %v1822, 32
    %v1825 = vpop.permute.xlu0 %1824
    %v1827 = vadd.f32 %v1817, %v1825
    %v1828 = vtanh.pop %v1827
    %1830 = vrot.lane.b32.xlu0 %v1828, 32
    %v1831 = vpop.permute.xlu0 %1830
    %v1833 = vmul.f32 %v1812, %v1831
    %v1835 = vrot.slane %v1833, 4
    %1836 = vrot.lane.b32.xlu0 %v1835, 64
    %v1837 = vpop.permute.xlu0 %1836
    %v1838 = vsel %vm67, %v1837, 0
    %1840 = vmatprep.subr.mxu0 0.0
    %1841 = vmatpush1.msra.mxu0 0.0
    %1842 = vmatprep.subr.mxu0 0.0
    %1843 = vmatpush1.msra.mxu0 0.0
    %1844 = vmatprep.subr.mxu0 0.0
    %1845 = vmatpush1.msra.mxu0 0.0
    %1846 = vmatprep.subr.mxu0 0.0
    %1847 = vmatpush1.msra.mxu0 0.0
    %1848 = vmatprep.subr.mxu0 0.0
    %1849 = vmatpush1.msra.mxu0 0.0
    %1850 = vmatprep.subr.mxu0 0.0
    %1851 = vmatpush1.msra.mxu0 0.0
    %1852 = vmatprep.subr.mxu0 0.0
    %1853 = vmatpush1.msra.mxu0 0.0
    %1854 = vmatprep.subr.mxu0 0.0
    %1855 = vmatpush1.msra.mxu0 0.0
    %1856 = vmatprep.subr.mxu0 0.0
    %1857 = vmatpush1.msra.mxu0 0.0
    %1858 = vmatprep.subr.mxu0 0.0
    %1859 = vmatpush1.msra.mxu0 0.0
    %1860 = vmatprep.subr.mxu0 0.0
    %1861 = vmatpush1.msra.mxu0 0.0
    %1862 = vmatprep.subr.mxu0 0.0
    %1863 = vmatpush1.msra.mxu0 0.0
    %1864 = vmatprep.subr.mxu0 0.0
    %1865 = vmatpush1.msra.mxu0 %v1008
    %1866 = vmatprep.subr.mxu0 0.0
    %1867 = vmatpush1.msra.mxu0 %v1007
    %1868 = vmatprep.subr.mxu0 0.0
    %1869 = vmatpush1.msra.mxu0 %v1006
    %1870 = vmatprep.subr.mxu0 0.0
    %1871 = vmatpush1.msra.mxu0 %v1005
    %1872 = vmatprep.subr.mxu0 0.0
    %1873 = vmatpush2.msra.mxu0 0.0
    %1874 = vmatprep.subr.mxu0 0.0
    %1875 = vmatpush2.msra.mxu0 0.0
    %1876 = vmatprep.subr.mxu0 0.0
    %1877 = vmatpush2.msra.mxu0 0.0
    %1878 = vmatprep.subr.mxu0 0.0
    %1879 = vmatpush2.msra.mxu0 0.0
    %1880 = vmatprep.subr.mxu0 0.0
    %1881 = vmatpush2.msra.mxu0 0.0
    %1882 = vmatprep.subr.mxu0 0.0
    %1883 = vmatpush2.msra.mxu0 0.0
    %1884 = vmatprep.subr.mxu0 0.0
    %1885 = vmatpush2.msra.mxu0 0.0
    %1886 = vmatprep.subr.mxu0 0.0
    %1887 = vmatpush2.msra.mxu0 0.0
    %1888 = vmatprep.subr.mxu0 0.0
    %1889 = vmatpush2.msra.mxu0 0.0
    %1890 = vmatprep.subr.mxu0 0.0
    %1891 = vmatpush2.msra.mxu0 0.0
    %1892 = vmatprep.subr.mxu0 0.0
    %1893 = vmatpush2.msra.mxu0 0.0
    %1894 = vmatprep.subr.mxu0 0.0
    %1895 = vmatpush2.msra.mxu0 0.0
    %1896 = vmatprep.subr.mxu0 0.0
    %1897 = vmatpush2.msra.mxu0 0.0
    %1898 = vmatprep.subr.mxu0 0.0
    %1899 = vmatpush2.msra.mxu0 0.0
    %1900 = vmatprep.subr.mxu0 0.0
    %1901 = vmatpush2.msra.mxu0 0.0
    %1902 = vmatprep.subr.mxu0 0.0
    %1903 = vmatpush2.msra.mxu0 0.0
    %1904 = vmatprep.mubr.f32.mxu0 0.0
    %1905 = vmatmul.mubr.f32.gmra.mxu0 %v1838
    %v1906 = vpop.f32.mrf.mxu0
    %v1907 = vadd.f32 0.0, %v1906
    %v1908 = vpop.f32.mrf.mxu0
    %1909 = vdwg.mxu0
    %v1911 = vrot.slane %v1907, 2
    %v1913 = vadd.f32 %v1099, %v1911
    %v1914 = vxor.u32 %v1913, 2147483648
    %v1915 = vmul.f32 %v1914, 1.442695
    %v1916 = vpow.pop %v1915
    %v1917 = vadd.f32 %v1916, 1.0
    %v1918 = vrcp.pop %v1917
    %v1919 = vmul.f32 1.0, %v1918
    %v1920 = vtanh.pop %v1913
    %v1922 = vrot.slane %v1827, 6
    %v1924 = vmul.f32 %v1919, %v1922
    %1926 = vrot.lane.b32.xlu0 %v1920, 32
    %v1927 = vpop.permute.xlu0 %1926
    %v1929 = vmul.f32 %v1919, %v1927
    %1931 = vrot.lane.b32.xlu0 %v1929, 32
    %v1932 = vpop.permute.xlu0 %1931
    %v1934 = vadd.f32 %v1924, %v1932
    %v1935 = vtanh.pop %v1934
    %1937 = vrot.lane.b32.xlu0 %v1935, 32
    %v1938 = vpop.permute.xlu0 %1937
    %v1940 = vmul.f32 %v1919, %v1938
    %v1941 = vld [vmem:[%s3] sm:$0x1]
    %v1943 = vlaneseq
    %v1944 = vshrl.u32 %v1943, 7
    %v1945 = vsub.s32 0, %v1944
    %v1946 = vrot.slane %v1941, %v1945
    %1947 = vrot.lane.b32.xlu0 %v1946, 64
    %v1948 = vpop.permute.xlu0 %1947
    %v1950 = vmul.f32 %v1940, %v1948
    %1952 = vrot.lane.b32.xlu0 %v1950, 64
    %v1953 = vpop.permute.xlu0 %1952
    %vm1955 = vcmask 261126
    %v1956 = vsel %vm1955, %v1953, 0.0
    %1957 = vadd.xlane.f32.xlu0 %v1956
    %v1958 = vpop.xlane.xlu0 %1957
    %v1959 = vld [vmem:[#allocation2] sm:$0x1]
    %v1961 = vlaneseq
    %v1962 = vshrl.u32 %v1961, 7
    %v1963 = vsub.s32 0, %v1962
    %v1964 = vrot.slane %v1959, %v1963
    %v1966 = vadd.f32 %v1958, %v1964
    %v1967 = vxor.u32 %v1966, 2147483648
    %v1968 = vmul.f32 %v1967, 1.442695
    %v1969 = vpow.pop %v1968
    %v1970 = vadd.f32 %v1969, 1.0
    %v1971 = vrcp.pop %v1970
    %v1972 = vmul.f32 1.0, %v1971
    %vm1973 = vcmask 7174
    %1974 = vst.msk [vmem:[%s5 - $0x6] sm:$0xc0] %vm1973, %v1972
    // Predicated region
    $region30: #{tpu_custom_call.1} parent=1 // pred_check
      _
    $region31: #{tpu_custom_call.1} parent=1 // pred_check_branch
      %1976 = sbr.rel (0) target = $region33
    $region32: #{tpu_custom_call.1} parent=1 // pred_region
      _
    $region33: #{tpu_custom_call.1} parent=1 // pred_fallthru
      _
    // Predicated region
    $region34: #{tpu_custom_call.1} parent=1 // pred_check
      _
    $region35: #{tpu_custom_call.1} parent=1 // pred_check_branch
      %1978 = sbr.rel (0) target = $region37
    $region36: #{tpu_custom_call.1} parent=1 // pred_region
      _
    $region37: #{tpu_custom_call.1} parent=1 // pred_fallthru
      _
    %1979 = vsyncpa [#allocation4], 1
    %1980 = vsyncpa [#allocation6], 1

</llo_original>
